<compile_context>
chip_gen: v7x
topology: tpu7x:2x2x1
jax: 0.10.0
libtpu: 0.0.40
codegen_flags: <defaults>
</compile_context>

<pallas_src>
import jax
import jax.numpy as jnp
from jax.experimental import pallas as pl
from jax.experimental.pallas import tpu as pltpu  # noqa: F401  (no TPU-specific API needed in this fused kernel)

_NEG_INF = -1e30
_LEAKY_SLOPE = 0.2  # GATConv default negative_slope


def _gat_conv(h_in, w_ref, p_ref, adj):
    """Dense single-head GATConv.  p_ref rows: [att_src, att_dst, bias]."""
    h = jnp.dot(h_in, w_ref[...], preferred_element_type=jnp.float32)       # (N, F)
    ones = jnp.ones_like(h)
    # e[i, j] = att_dst . h[i] + att_src . h[j]  (edge j -> i), computed as two
    # full-width (N,F)x(N,F)->(N,N) MXU contractions (no (F,1) matmuls, no
    # (N,1)<->(1,N) transposes).
    e = (jnp.einsum('if,jf->ij', h * p_ref[1:2, :], ones,
                    preferred_element_type=jnp.float32)
         + jnp.einsum('if,jf->ij', ones, h * p_ref[0:1, :],
                      preferred_element_type=jnp.float32))
    e = jnp.where(e >= 0, e, _LEAKY_SLOPE * e)            # LeakyReLU(0.2)   (VPU)
    e = jnp.where(adj > 0.0, e, _NEG_INF)                 # restrict to edge set
    m = jnp.max(e, axis=-1, keepdims=True)                # XLU
    p = jnp.exp(e - m)                                    # EUP
    s = jnp.sum(p, axis=-1, keepdims=True)                # XLU
    attn = p * pl.reciprocal(s, approx=True)              # EUP approx reciprocal
    return jnp.dot(attn, h, preferred_element_type=jnp.float32) + p_ref[2:3, :]


def encoder2_kernel(x_ref, adj_ref, w_skip_ref, w_lin3_ref, bl_ref,
                    w1_ref, p1_ref, w2_ref, p2_ref, w3_ref, p3_ref, out_ref):
    x = x_ref[...]
    adj = adj_ref[...]
    # Skip branch (linear2 for isfirstLayer=False; linear1 would just have a (1,H) weight).
    x1 = jnp.dot(x, w_skip_ref[...], preferred_element_type=jnp.float32) + bl_ref[0:1, :]
    # GAT(num_layers=3): conv -> relu -> conv -> relu -> conv.
    g = jnp.maximum(_gat_conv(x, w1_ref, p1_ref, adj), 0.0)
    g = jnp.maximum(_gat_conv(g, w2_ref, p2_ref, adj), 0.0)
    g = _gat_conv(g, w3_ref, p3_ref, adj)
    # linear3, then residual combine: out = x1 + relu(x2).
    x2 = jnp.dot(g, w_lin3_ref[...], preferred_element_type=jnp.float32) + bl_ref[1:2, :]
    out_ref[...] = (x1 + jnp.maximum(x2, 0.0)).astype(out_ref.dtype)


def _dense_adjacency(edge_index, num_nodes):
    """edge_index (2, E) -> dense f32 mask, adj[i, j] = 1 iff edge j->i or i == j
    (GATConv add_self_loops=True).  Data-dependent scatter: done in plain JAX."""
    src, dst = edge_index[0], edge_index[1]
    adj = jnp.zeros((num_nodes, num_nodes), jnp.float32).at[dst, src].set(1.0)
    return jnp.maximum(adj, jnp.eye(num_nodes, dtype=jnp.float32))


def encoder2_layer_forward(x, edge_index, params):
    """Fused Encoder2_Layer forward (isfirstLayer=False branch).

    x: (N, H) float32 node features.  edge_index: (2, E) int32 (src, dst).
    All weight matrices are passed in (in_features, out_features) layout
    (i.e. torch .weight.T).
    """
    n, h = x.shape
    adj = _dense_adjacency(edge_index, n)
    # Pack the tiny per-layer vectors so each GAT layer needs one small DMA
    # instead of three, and the two linear biases ship as one block.
    bl = jnp.stack([params['b_skip'], params['b_lin3']])                          # (2, H)
    p1 = jnp.stack([params['att_src1'], params['att_dst1'], params['bias1']])    # (3, H/2)
    p2 = jnp.stack([params['att_src2'], params['att_dst2'], params['bias2']])    # (3, H/2)
    p3 = jnp.stack([params['att_src3'], params['att_dst3'], params['bias3']])    # (3, H)

    args = (x, adj, params['w_skip'], params['w_lin3'], bl,
            params['w_gat1'], p1, params['w_gat2'], p2, params['w_gat3'], p3)

    # Everything is VMEM-resident for one fused launch (block shape == array shape).
    full = lambda a: pl.BlockSpec(a.shape, lambda: (0,) * a.ndim)
    return pl.pallas_call(
        encoder2_kernel,
        out_shape=jax.ShapeDtypeStruct((n, h), jnp.float32),
        grid=(),
        in_specs=[full(a) for a in args],
        out_specs=pl.BlockSpec((n, h), lambda: (0, 0)),
    )(*args)


# ----------------------------- reference + demo -----------------------------

def _gat_conv_ref(x, w, att_src, att_dst, bias, adj):
    h = x @ w
    a_src = h @ att_src
    a_dst = h @ att_dst
    e = a_dst[:, None] + a_src[None, :]
    e = jnp.where(e >= 0, e, 0.2 * e)
    e = jnp.where(adj > 0, e, -jnp.inf)
    attn = jax.nn.softmax(e, axis=-1)
    return attn @ h + bias


def _encoder2_ref(x, adj, p):
    x1 = x @ p['w_skip'] + p['b_skip']
    g = jnp.maximum(_gat_conv_ref(x, p['w_gat1'], p['att_src1'], p['att_dst1'], p['bias1'], adj), 0.0)
    g = jnp.maximum(_gat_conv_ref(g, p['w_gat2'], p['att_src2'], p['att_dst2'], p['bias2'], adj), 0.0)
    g = _gat_conv_ref(g, p['w_gat3'], p['att_src3'], p['att_dst3'], p['bias3'], adj)
    x2 = g @ p['w_lin3'] + p['b_lin3']
    return x1 + jnp.maximum(x2, 0.0)


def _init_params(key, hidden_dim):
    h2 = hidden_dim // 2
    ks = jax.random.split(key, 16)

    def mat(k, fan_in, fan_out):
        b = 1.0 / (fan_in ** 0.5)
        return jax.random.uniform(k, (fan_in, fan_out), jnp.float32, -b, b)

    def vec(k, n, fan_in):
        b = 1.0 / (fan_in ** 0.5)
        return jax.random.uniform(k, (n,), jnp.float32, -b, b)

    return dict(
        # skip branch = linear2 (hidden -> hidden), (in, out) layout
        w_skip=mat(ks[0], hidden_dim, hidden_dim), b_skip=vec(ks[1], hidden_dim, hidden_dim),
        # linear3 (hidden -> hidden)
        w_lin3=mat(ks[2], hidden_dim, hidden_dim), b_lin3=vec(ks[3], hidden_dim, hidden_dim),
        # GATConv1: hidden -> hidden/2
        w_gat1=mat(ks[4], hidden_dim, h2),
        att_src1=vec(ks[5], h2, h2), att_dst1=vec(ks[6], h2, h2), bias1=vec(ks[7], h2, h2),
        # GATConv2: hidden/2 -> hidden/2
        w_gat2=mat(ks[8], h2, h2),
        att_src2=vec(ks[9], h2, h2), att_dst2=vec(ks[10], h2, h2), bias2=vec(ks[11], h2, h2),
        # GATConv3: hidden/2 -> hidden
        w_gat3=mat(ks[12], h2, hidden_dim),
        att_src3=vec(ks[13], hidden_dim, h2), att_dst3=vec(ks[14], hidden_dim, h2),
        bias3=vec(ks[15], hidden_dim, h2),
    )


if __name__ == "__main__":
    hidden_dim = 32
    n_nodes = 64

    key = jax.random.PRNGKey(0)
    kx, kp = jax.random.split(key)
    x = jax.random.normal(kx, (n_nodes, hidden_dim), dtype=jnp.float32)
    params = _init_params(kp, hidden_dim)

    # Deterministic graph: bidirectional ring + one chord per node (E = 3N edges).
    i = jnp.arange(n_nodes, dtype=jnp.int32)
    src = jnp.concatenate([i, i, i])
    dst = jnp.concatenate([(i + 1) % n_nodes, (i - 1) % n_nodes, (i + 5) % n_nodes])
    edge_index = jnp.stack([src, dst])  # (2, 3N)

    out = encoder2_layer_forward(x, edge_index, params)
    out = jax.block_until_ready(out)

    adj = _dense_adjacency(edge_index, n_nodes)
    ref = _encoder2_ref(x, adj, params)

    assert out.shape == (n_nodes, hidden_dim)
    assert bool(jnp.all(jnp.isfinite(out))), "non-finite values in kernel output"
    max_err = float(jnp.max(jnp.abs(out - ref)))
    # Tolerance covers the EUP approximate-reciprocal softmax normalization.
    assert jnp.allclose(out, ref, atol=2e-2, rtol=2e-2), f"mismatch vs reference (max abs err {max_err})"

    print("KERNEL_OK")
</pallas_src>

<mosaic_0001>
module attributes {stable_mosaic.version = 11 : i64} {
  func.func @encoder2_kernel(%arg0: memref<64x32xf32, #tpu.memory_space<vmem>>, %arg1: memref<64x64xf32, #tpu.memory_space<vmem>>, %arg2: memref<32x32xf32, #tpu.memory_space<vmem>>, %arg3: memref<32x32xf32, #tpu.memory_space<vmem>>, %arg4: memref<2x32xf32, #tpu.memory_space<vmem>>, %arg5: memref<32x16xf32, #tpu.memory_space<vmem>>, %arg6: memref<3x16xf32, #tpu.memory_space<vmem>>, %arg7: memref<16x16xf32, #tpu.memory_space<vmem>>, %arg8: memref<3x16xf32, #tpu.memory_space<vmem>>, %arg9: memref<16x32xf32, #tpu.memory_space<vmem>>, %arg10: memref<3x32xf32, #tpu.memory_space<vmem>>, %arg11: memref<64x32xf32, #tpu.memory_space<vmem>>) attributes {dimension_semantics = [], scalar_prefetch = 0 : i64, scratch_operands = 0 : i64, tpu.core_type = #tpu.core_type<tc>} {
    %c0 = arith.constant 0 : index
    %c0_0 = arith.constant 0 : index
    %0 = vector.load %arg0[%c0, %c0_0] : memref<64x32xf32, #tpu.memory_space<vmem>>, vector<64x32xf32>
    %c0_1 = arith.constant 0 : index
    %c0_2 = arith.constant 0 : index
    %1 = vector.load %arg1[%c0_1, %c0_2] : memref<64x64xf32, #tpu.memory_space<vmem>>, vector<64x64xf32>
    %c0_3 = arith.constant 0 : index
    %c0_4 = arith.constant 0 : index
    %2 = vector.load %arg2[%c0_3, %c0_4] : memref<32x32xf32, #tpu.memory_space<vmem>>, vector<32x32xf32>
    %cst = arith.constant dense<0.000000e+00> : vector<64x32xf32>
    %3 = tpu.matmul %0, %2, %cst {dimension_numbers = #tpu.dot_dimension_numbers<[1], [0], [0], [1], [0, 0, 1, 1], [], []>} : vector<64x32xf32>, vector<32x32xf32>, vector<64x32xf32> -> vector<64x32xf32>
    %c0_5 = arith.constant 0 : index
    %c0_6 = arith.constant 0 : index
    %4 = vector.load %arg4[%c0_5, %c0_6] : memref<2x32xf32, #tpu.memory_space<vmem>>, vector<1x32xf32>
    %5 = vector.broadcast %4 : vector<1x32xf32> to vector<64x32xf32>
    %6 = arith.addf %3, %5 : vector<64x32xf32>
    %c0_7 = arith.constant 0 : index
    %c0_8 = arith.constant 0 : index
    %7 = vector.load %arg5[%c0_7, %c0_8] : memref<32x16xf32, #tpu.memory_space<vmem>>, vector<32x16xf32>
    %cst_9 = arith.constant dense<0.000000e+00> : vector<64x16xf32>
    %8 = tpu.matmul %0, %7, %cst_9 {dimension_numbers = #tpu.dot_dimension_numbers<[1], [0], [0], [1], [0, 0, 1, 1], [], []>} : vector<64x32xf32>, vector<32x16xf32>, vector<64x16xf32> -> vector<64x16xf32>
    %cst_10 = arith.constant 1.000000e+00 : f32
    %9 = vector.broadcast %cst_10 : f32 to vector<64x16xf32>
    %c1 = arith.constant 1 : index
    %c0_11 = arith.constant 0 : index
    %10 = vector.load %arg6[%c1, %c0_11] : memref<3x16xf32, #tpu.memory_space<vmem>>, vector<1x16xf32>
    %11 = vector.broadcast %10 : vector<1x16xf32> to vector<64x16xf32>
    %12 = arith.mulf %8, %11 : vector<64x16xf32>
    "tpu.trace_start"() <{level = 10 : i32, message = "if,jf->ij"}> : () -> ()
    %cst_12 = arith.constant dense<0.000000e+00> : vector<64x64xf32>
    %13 = tpu.matmul %12, %9, %cst_12 {dimension_numbers = #tpu.dot_dimension_numbers<[1], [1], [0], [0], [0, 0, 1, 0], [], []>} : vector<64x16xf32>, vector<64x16xf32>, vector<64x64xf32> -> vector<64x64xf32>
    "tpu.trace_stop"() : () -> ()
    %c0_13 = arith.constant 0 : index
    %c0_14 = arith.constant 0 : index
    %14 = vector.load %arg6[%c0_13, %c0_14] : memref<3x16xf32, #tpu.memory_space<vmem>>, vector<1x16xf32>
    %15 = vector.broadcast %14 : vector<1x16xf32> to vector<64x16xf32>
    %16 = arith.mulf %8, %15 : vector<64x16xf32>
    "tpu.trace_start"() <{level = 10 : i32, message = "if,jf->ij"}> : () -> ()
    %cst_15 = arith.constant dense<0.000000e+00> : vector<64x64xf32>
    %17 = tpu.matmul %9, %16, %cst_15 {dimension_numbers = #tpu.dot_dimension_numbers<[1], [1], [0], [0], [0, 0, 1, 0], [], []>} : vector<64x16xf32>, vector<64x16xf32>, vector<64x64xf32> -> vector<64x64xf32>
    "tpu.trace_stop"() : () -> ()
    %18 = arith.addf %13, %17 : vector<64x64xf32>
    %cst_16 = arith.constant 0.000000e+00 : f32
    %19 = vector.broadcast %cst_16 : f32 to vector<64x64xf32>
    %20 = arith.cmpf oge, %18, %19 : vector<64x64xf32>
    %cst_17 = arith.constant 2.000000e-01 : f32
    %21 = vector.broadcast %cst_17 : f32 to vector<64x64xf32>
    %22 = arith.mulf %21, %18 : vector<64x64xf32>
    %23 = arith.select %20, %18, %22 : vector<64x64xi1>, vector<64x64xf32>
    %cst_18 = arith.constant 0.000000e+00 : f32
    %24 = vector.broadcast %cst_18 : f32 to vector<64x64xf32>
    %25 = arith.cmpf ogt, %1, %24 : vector<64x64xf32>
    %cst_19 = arith.constant -1.000000e+30 : f32
    %26 = vector.broadcast %cst_19 : f32 to vector<64x64xf32>
    %27 = arith.select %25, %23, %26 : vector<64x64xi1>, vector<64x64xf32>
    %cst_20 = arith.constant dense<0xFF800000> : vector<64xf32>
    %28 = vector.multi_reduction <maximumf>, %27, %cst_20 [1] : vector<64x64xf32> to vector<64xf32>
    %29 = vector.shape_cast %28 : vector<64xf32> to vector<64x1xf32>
    %30 = vector.broadcast %29 : vector<64x1xf32> to vector<64x64xf32>
    %31 = arith.subf %27, %30 : vector<64x64xf32>
    %32 = math.exp %31 : vector<64x64xf32>
    %cst_21 = arith.constant dense<0.000000e+00> : vector<64xf32>
    %33 = vector.multi_reduction <add>, %32, %cst_21 [1] : vector<64x64xf32> to vector<64xf32>
    %34 = vector.shape_cast %33 : vector<64xf32> to vector<64x1xf32>
    %35 = tpu.reciprocal %34 {approx = true} : vector<64x1xf32> -> vector<64x1xf32>
    %36 = vector.broadcast %35 : vector<64x1xf32> to vector<64x64xf32>
    %37 = arith.mulf %32, %36 : vector<64x64xf32>
    %cst_22 = arith.constant dense<0.000000e+00> : vector<64x16xf32>
    %38 = tpu.matmul %37, %8, %cst_22 {dimension_numbers = #tpu.dot_dimension_numbers<[1], [0], [0], [1], [0, 0, 1, 1], [], []>} : vector<64x64xf32>, vector<64x16xf32>, vector<64x16xf32> -> vector<64x16xf32>
    %c2 = arith.constant 2 : index
    %c0_23 = arith.constant 0 : index
    %39 = vector.load %arg6[%c2, %c0_23] : memref<3x16xf32, #tpu.memory_space<vmem>>, vector<1x16xf32>
    %40 = vector.broadcast %39 : vector<1x16xf32> to vector<64x16xf32>
    %41 = arith.addf %38, %40 : vector<64x16xf32>
    %cst_24 = arith.constant 0.000000e+00 : f32
    %42 = vector.broadcast %cst_24 : f32 to vector<64x16xf32>
    %43 = arith.maximumf %41, %42 : vector<64x16xf32>
    %c0_25 = arith.constant 0 : index
    %c0_26 = arith.constant 0 : index
    %44 = vector.load %arg7[%c0_25, %c0_26] : memref<16x16xf32, #tpu.memory_space<vmem>>, vector<16x16xf32>
    %cst_27 = arith.constant dense<0.000000e+00> : vector<64x16xf32>
    %45 = tpu.matmul %43, %44, %cst_27 {dimension_numbers = #tpu.dot_dimension_numbers<[1], [0], [0], [1], [0, 0, 1, 1], [], []>} : vector<64x16xf32>, vector<16x16xf32>, vector<64x16xf32> -> vector<64x16xf32>
    %cst_28 = arith.constant 1.000000e+00 : f32
    %46 = vector.broadcast %cst_28 : f32 to vector<64x16xf32>
    %c1_29 = arith.constant 1 : index
    %c0_30 = arith.constant 0 : index
    %47 = vector.load %arg8[%c1_29, %c0_30] : memref<3x16xf32, #tpu.memory_space<vmem>>, vector<1x16xf32>
    %48 = vector.broadcast %47 : vector<1x16xf32> to vector<64x16xf32>
    %49 = arith.mulf %45, %48 : vector<64x16xf32>
    "tpu.trace_start"() <{level = 10 : i32, message = "if,jf->ij"}> : () -> ()
    %cst_31 = arith.constant dense<0.000000e+00> : vector<64x64xf32>
    %50 = tpu.matmul %49, %46, %cst_31 {dimension_numbers = #tpu.dot_dimension_numbers<[1], [1], [0], [0], [0, 0, 1, 0], [], []>} : vector<64x16xf32>, vector<64x16xf32>, vector<64x64xf32> -> vector<64x64xf32>
    "tpu.trace_stop"() : () -> ()
    %c0_32 = arith.constant 0 : index
    %c0_33 = arith.constant 0 : index
    %51 = vector.load %arg8[%c0_32, %c0_33] : memref<3x16xf32, #tpu.memory_space<vmem>>, vector<1x16xf32>
    %52 = vector.broadcast %51 : vector<1x16xf32> to vector<64x16xf32>
    %53 = arith.mulf %45, %52 : vector<64x16xf32>
    "tpu.trace_start"() <{level = 10 : i32, message = "if,jf->ij"}> : () -> ()
    %cst_34 = arith.constant dense<0.000000e+00> : vector<64x64xf32>
    %54 = tpu.matmul %46, %53, %cst_34 {dimension_numbers = #tpu.dot_dimension_numbers<[1], [1], [0], [0], [0, 0, 1, 0], [], []>} : vector<64x16xf32>, vector<64x16xf32>, vector<64x64xf32> -> vector<64x64xf32>
    "tpu.trace_stop"() : () -> ()
    %55 = arith.addf %50, %54 : vector<64x64xf32>
    %cst_35 = arith.constant 0.000000e+00 : f32
    %56 = vector.broadcast %cst_35 : f32 to vector<64x64xf32>
    %57 = arith.cmpf oge, %55, %56 : vector<64x64xf32>
    %cst_36 = arith.constant 2.000000e-01 : f32
    %58 = vector.broadcast %cst_36 : f32 to vector<64x64xf32>
    %59 = arith.mulf %58, %55 : vector<64x64xf32>
    %60 = arith.select %57, %55, %59 : vector<64x64xi1>, vector<64x64xf32>
    %cst_37 = arith.constant 0.000000e+00 : f32
    %61 = vector.broadcast %cst_37 : f32 to vector<64x64xf32>
    %62 = arith.cmpf ogt, %1, %61 : vector<64x64xf32>
    %cst_38 = arith.constant -1.000000e+30 : f32
    %63 = vector.broadcast %cst_38 : f32 to vector<64x64xf32>
    %64 = arith.select %62, %60, %63 : vector<64x64xi1>, vector<64x64xf32>
    %cst_39 = arith.constant dense<0xFF800000> : vector<64xf32>
    %65 = vector.multi_reduction <maximumf>, %64, %cst_39 [1] : vector<64x64xf32> to vector<64xf32>
    %66 = vector.shape_cast %65 : vector<64xf32> to vector<64x1xf32>
    %67 = vector.broadcast %66 : vector<64x1xf32> to vector<64x64xf32>
    %68 = arith.subf %64, %67 : vector<64x64xf32>
    %69 = math.exp %68 : vector<64x64xf32>
    %cst_40 = arith.constant dense<0.000000e+00> : vector<64xf32>
    %70 = vector.multi_reduction <add>, %69, %cst_40 [1] : vector<64x64xf32> to vector<64xf32>
    %71 = vector.shape_cast %70 : vector<64xf32> to vector<64x1xf32>
    %72 = tpu.reciprocal %71 {approx = true} : vector<64x1xf32> -> vector<64x1xf32>
    %73 = vector.broadcast %72 : vector<64x1xf32> to vector<64x64xf32>
    %74 = arith.mulf %69, %73 : vector<64x64xf32>
    %cst_41 = arith.constant dense<0.000000e+00> : vector<64x16xf32>
    %75 = tpu.matmul %74, %45, %cst_41 {dimension_numbers = #tpu.dot_dimension_numbers<[1], [0], [0], [1], [0, 0, 1, 1], [], []>} : vector<64x64xf32>, vector<64x16xf32>, vector<64x16xf32> -> vector<64x16xf32>
    %c2_42 = arith.constant 2 : index
    %c0_43 = arith.constant 0 : index
    %76 = vector.load %arg8[%c2_42, %c0_43] : memref<3x16xf32, #tpu.memory_space<vmem>>, vector<1x16xf32>
    %77 = vector.broadcast %76 : vector<1x16xf32> to vector<64x16xf32>
    %78 = arith.addf %75, %77 : vector<64x16xf32>
    %cst_44 = arith.constant 0.000000e+00 : f32
    %79 = vector.broadcast %cst_44 : f32 to vector<64x16xf32>
    %80 = arith.maximumf %78, %79 : vector<64x16xf32>
    %c0_45 = arith.constant 0 : index
    %c0_46 = arith.constant 0 : index
    %81 = vector.load %arg9[%c0_45, %c0_46] : memref<16x32xf32, #tpu.memory_space<vmem>>, vector<16x32xf32>
    %cst_47 = arith.constant dense<0.000000e+00> : vector<64x32xf32>
    %82 = tpu.matmul %80, %81, %cst_47 {dimension_numbers = #tpu.dot_dimension_numbers<[1], [0], [0], [1], [0, 0, 1, 1], [], []>} : vector<64x16xf32>, vector<16x32xf32>, vector<64x32xf32> -> vector<64x32xf32>
    %cst_48 = arith.constant 1.000000e+00 : f32
    %83 = vector.broadcast %cst_48 : f32 to vector<64x32xf32>
    %c1_49 = arith.constant 1 : index
    %c0_50 = arith.constant 0 : index
    %84 = vector.load %arg10[%c1_49, %c0_50] : memref<3x32xf32, #tpu.memory_space<vmem>>, vector<1x32xf32>
    %85 = vector.broadcast %84 : vector<1x32xf32> to vector<64x32xf32>
    %86 = arith.mulf %82, %85 : vector<64x32xf32>
    "tpu.trace_start"() <{level = 10 : i32, message = "if,jf->ij"}> : () -> ()
    %cst_51 = arith.constant dense<0.000000e+00> : vector<64x64xf32>
    %87 = tpu.matmul %86, %83, %cst_51 {dimension_numbers = #tpu.dot_dimension_numbers<[1], [1], [0], [0], [0, 0, 1, 0], [], []>} : vector<64x32xf32>, vector<64x32xf32>, vector<64x64xf32> -> vector<64x64xf32>
    "tpu.trace_stop"() : () -> ()
    %c0_52 = arith.constant 0 : index
    %c0_53 = arith.constant 0 : index
    %88 = vector.load %arg10[%c0_52, %c0_53] : memref<3x32xf32, #tpu.memory_space<vmem>>, vector<1x32xf32>
    %89 = vector.broadcast %88 : vector<1x32xf32> to vector<64x32xf32>
    %90 = arith.mulf %82, %89 : vector<64x32xf32>
    "tpu.trace_start"() <{level = 10 : i32, message = "if,jf->ij"}> : () -> ()
    %cst_54 = arith.constant dense<0.000000e+00> : vector<64x64xf32>
    %91 = tpu.matmul %83, %90, %cst_54 {dimension_numbers = #tpu.dot_dimension_numbers<[1], [1], [0], [0], [0, 0, 1, 0], [], []>} : vector<64x32xf32>, vector<64x32xf32>, vector<64x64xf32> -> vector<64x64xf32>
    "tpu.trace_stop"() : () -> ()
    %92 = arith.addf %87, %91 : vector<64x64xf32>
    %cst_55 = arith.constant 0.000000e+00 : f32
    %93 = vector.broadcast %cst_55 : f32 to vector<64x64xf32>
    %94 = arith.cmpf oge, %92, %93 : vector<64x64xf32>
    %cst_56 = arith.constant 2.000000e-01 : f32
    %95 = vector.broadcast %cst_56 : f32 to vector<64x64xf32>
    %96 = arith.mulf %95, %92 : vector<64x64xf32>
    %97 = arith.select %94, %92, %96 : vector<64x64xi1>, vector<64x64xf32>
    %cst_57 = arith.constant 0.000000e+00 : f32
    %98 = vector.broadcast %cst_57 : f32 to vector<64x64xf32>
    %99 = arith.cmpf ogt, %1, %98 : vector<64x64xf32>
    %cst_58 = arith.constant -1.000000e+30 : f32
    %100 = vector.broadcast %cst_58 : f32 to vector<64x64xf32>
    %101 = arith.select %99, %97, %100 : vector<64x64xi1>, vector<64x64xf32>
    %cst_59 = arith.constant dense<0xFF800000> : vector<64xf32>
    %102 = vector.multi_reduction <maximumf>, %101, %cst_59 [1] : vector<64x64xf32> to vector<64xf32>
    %103 = vector.shape_cast %102 : vector<64xf32> to vector<64x1xf32>
    %104 = vector.broadcast %103 : vector<64x1xf32> to vector<64x64xf32>
    %105 = arith.subf %101, %104 : vector<64x64xf32>
    %106 = math.exp %105 : vector<64x64xf32>
    %cst_60 = arith.constant dense<0.000000e+00> : vector<64xf32>
    %107 = vector.multi_reduction <add>, %106, %cst_60 [1] : vector<64x64xf32> to vector<64xf32>
    %108 = vector.shape_cast %107 : vector<64xf32> to vector<64x1xf32>
    %109 = tpu.reciprocal %108 {approx = true} : vector<64x1xf32> -> vector<64x1xf32>
    %110 = vector.broadcast %109 : vector<64x1xf32> to vector<64x64xf32>
    %111 = arith.mulf %106, %110 : vector<64x64xf32>
    %cst_61 = arith.constant dense<0.000000e+00> : vector<64x32xf32>
    %112 = tpu.matmul %111, %82, %cst_61 {dimension_numbers = #tpu.dot_dimension_numbers<[1], [0], [0], [1], [0, 0, 1, 1], [], []>} : vector<64x64xf32>, vector<64x32xf32>, vector<64x32xf32> -> vector<64x32xf32>
    %c2_62 = arith.constant 2 : index
    %c0_63 = arith.constant 0 : index
    %113 = vector.load %arg10[%c2_62, %c0_63] : memref<3x32xf32, #tpu.memory_space<vmem>>, vector<1x32xf32>
    %114 = vector.broadcast %113 : vector<1x32xf32> to vector<64x32xf32>
    %115 = arith.addf %112, %114 : vector<64x32xf32>
    %c0_64 = arith.constant 0 : index
    %c0_65 = arith.constant 0 : index
    %116 = vector.load %arg3[%c0_64, %c0_65] : memref<32x32xf32, #tpu.memory_space<vmem>>, vector<32x32xf32>
    %cst_66 = arith.constant dense<0.000000e+00> : vector<64x32xf32>
    %117 = tpu.matmul %115, %116, %cst_66 {dimension_numbers = #tpu.dot_dimension_numbers<[1], [0], [0], [1], [0, 0, 1, 1], [], []>} : vector<64x32xf32>, vector<32x32xf32>, vector<64x32xf32> -> vector<64x32xf32>
    %c1_67 = arith.constant 1 : index
    %c0_68 = arith.constant 0 : index
    %118 = vector.load %arg4[%c1_67, %c0_68] : memref<2x32xf32, #tpu.memory_space<vmem>>, vector<1x32xf32>
    %119 = vector.broadcast %118 : vector<1x32xf32> to vector<64x32xf32>
    %120 = arith.addf %117, %119 : vector<64x32xf32>
    %cst_69 = arith.constant 0.000000e+00 : f32
    %121 = vector.broadcast %cst_69 : f32 to vector<64x32xf32>
    %122 = arith.maximumf %120, %121 : vector<64x32xf32>
    %123 = arith.addf %6, %122 : vector<64x32xf32>
    %c0_70 = arith.constant 0 : index
    %c0_71 = arith.constant 0 : index
    %124 = vector.load %arg11[%c0_70, %c0_71] : memref<64x32xf32, #tpu.memory_space<vmem>>, vector<64x32xf32>
    tpu.vector_store %arg11[%c0_70, %c0_71], %123 {strides = array<i32>} : memref<64x32xf32, #tpu.memory_space<vmem>>, vector<64x32xf32>,
    return
  }
}

</mosaic_0001>

<llo_original>
// kernel: tpu_custom_call.1
$region0: #{tpu_custom_call.1}
  #allocation0 [shape = 'u32[]', space=smem, size = 0x4, offset = 0x4, fixed_abs, tag = 'smem constant byte address 0x4 - core index']
  #allocation1 [shape = 'u32[144,128]{1,0:T(1,128)}', space=vmem, size = 0x12000, scoped, tag = 'internal scratch']
  %s0 = inlined_call_operand.vmem [shape: f32[64,32], index: 0, kind: input, shape index: {}]
  %s1 = inlined_call_operand.vmem [shape: f32[64,64], index: 1, kind: input, shape index: {}]
  %s2 = inlined_call_operand.vmem [shape: f32[32,32], index: 2, kind: input, shape index: {}]
  %s3 = inlined_call_operand.vmem [shape: f32[32,32], index: 3, kind: input, shape index: {}]
  %s4 = inlined_call_operand.hbm [shape: f32[2,32], index: 4, kind: input, shape index: {}]
  %s5 = inlined_call_operand.vmem [shape: f32[32,16], index: 5, kind: input, shape index: {}]
  %s6 = inlined_call_operand.hbm [shape: f32[3,16], index: 6, kind: input, shape index: {}]
  %s7 = inlined_call_operand.vmem [shape: f32[16,16], index: 7, kind: input, shape index: {}]
  %s8 = inlined_call_operand.hbm [shape: f32[3,16], index: 8, kind: input, shape index: {}]
  %s9 = inlined_call_operand.vmem [shape: f32[16,32], index: 9, kind: input, shape index: {}]
  %s10 = inlined_call_operand.vmem [shape: f32[3,32], index: 10, kind: input, shape index: {}]
  %s11 = inlined_call_operand.vmem [shape: f32[64,32], index: 11, kind: output, shape index: {}]
  %s12 = sld [smem:[#allocation0]]
  $region66: #{tpu_custom_call.1} parent=0
    _
  %s14 = ssub.s32 1, %s12
  %s15 = scalar_select 0, %s14, %s12
  $region1: #{tpu_custom_call.1} parent=0
    #allocation2 [shape = 'u8[1024]{0}', space=vmem, size = 0x400, scoped, tag = 'input window, operand 4, single buffered']
    #allocation3 [shape = 's32[1]{0}', space=sflag, size = 0x4, scoped, tag = 'scoped memory for tpu_custom_call.1']
    #allocation4 [shape = 'u8[2048]{0}', space=vmem, size = 0x800, scoped, tag = 'input window, operand 6, single buffered']
    #allocation5 [shape = 's32[1]{0}', space=sflag, size = 0x4, scoped, tag = 'scoped memory for tpu_custom_call.1']
    #allocation6 [shape = 'u8[2048]{0}', space=vmem, size = 0x800, scoped, tag = 'input window, operand 8, single buffered']
    %16 = vsyncpa [#allocation3], 0
    %17 = vsyncpa [#allocation5], 0
    // Predicated region
    $region2: #{tpu_custom_call.1} parent=1 // pred_check
      _
    $region3: #{tpu_custom_call.1} parent=1 // pred_check_branch
      %19 = sbr.rel (0) target = $region5
    $region4: #{tpu_custom_call.1} parent=1 // pred_region
      _
    $region5: #{tpu_custom_call.1} parent=1 // pred_fallthru
      _
    // Predicated region
    $region6: #{tpu_custom_call.1} parent=1 // pred_check
      _
    $region7: #{tpu_custom_call.1} parent=1 // pred_check_branch
      %21 = sbr.rel (0) target = $region9
    $region8: #{tpu_custom_call.1} parent=1 // pred_region
      _
    $region9: #{tpu_custom_call.1} parent=1 // pred_fallthru
      _
    // Predicated region
    $region10: #{tpu_custom_call.1} parent=1 // pred_check
      _
    $region11: #{tpu_custom_call.1} parent=1 // pred_check_branch
      %23 = sbr.rel (0) target = $region13
    $region12: #{tpu_custom_call.1} parent=1 // pred_region
      _
    $region13: #{tpu_custom_call.1} parent=1 // pred_fallthru
      _
    // Predicated region
    $region14: #{tpu_custom_call.1} parent=1 // pred_check
      _
    $region15: #{tpu_custom_call.1} parent=1 // pred_check_branch
      %25 = sbr.rel (0) target = $region17
    $region16: #{tpu_custom_call.1} parent=1 // pred_region
      _
    $region17: #{tpu_custom_call.1} parent=1 // pred_fallthru
      _
    // Predicated region
    $region18: #{tpu_custom_call.1} parent=1 // pred_check
      _
    $region19: #{tpu_custom_call.1} parent=1 // pred_check_branch
      %27 = sbr.rel (0) target = $region21
    $region20: #{tpu_custom_call.1} parent=1 // pred_region
      %s29 = ssub.s32 32, 32
      %30 = vsyncadd [#allocation3], %s29
      %s32 = sshll.u32 [#allocation2], 4
      %s33 = int_to_ptr.vmem [resolvable:$true] %s32
      %35 = dma.hbm_to_vmem [thread:$0]  %s4, 32, %s33, [#allocation3]
    $region21: #{tpu_custom_call.1} parent=1 // pred_fallthru
      _
    // Predicated region
    $region22: #{tpu_custom_call.1} parent=1 // pred_check
      _
    $region23: #{tpu_custom_call.1} parent=1 // pred_check_branch
      %37 = sbr.rel (0) target = $region25
    $region24: #{tpu_custom_call.1} parent=1 // pred_region
      _
    $region25: #{tpu_custom_call.1} parent=1 // pred_fallthru
      _
    // Predicated region
    $region26: #{tpu_custom_call.1} parent=1 // pred_check
      _
    $region27: #{tpu_custom_call.1} parent=1 // pred_check_branch
      %39 = sbr.rel (0) target = $region29
    $region28: #{tpu_custom_call.1} parent=1 // pred_region
      %s41 = ssub.s32 64, 64
      %42 = vsyncadd [#allocation5], %s41
      %s44 = sshll.u32 [#allocation4], 4
      %s45 = int_to_ptr.vmem [resolvable:$true] %s44
      %47 = dma.hbm_to_vmem [thread:$0]  %s6, 64, %s45, [#allocation5]
    $region29: #{tpu_custom_call.1} parent=1 // pred_fallthru
      _
    // Predicated region
    $region30: #{tpu_custom_call.1} parent=1 // pred_check
      _
    $region31: #{tpu_custom_call.1} parent=1 // pred_check_branch
      %49 = sbr.rel (0) target = $region33
    $region32: #{tpu_custom_call.1} parent=1 // pred_region
      _
    $region33: #{tpu_custom_call.1} parent=1 // pred_fallthru
      _
    // Predicated region
    $region34: #{tpu_custom_call.1} parent=1 // pred_check
      _
    $region35: #{tpu_custom_call.1} parent=1 // pred_check_branch
      %51 = sbr.rel (0) target = $region37
    $region36: #{tpu_custom_call.1} parent=1 // pred_region
      %s53 = ssub.s32 64, 64
      %54 = vsyncadd [#allocation5], %s53
      %s56 = sshll.u32 [#allocation6], 4
      %s57 = int_to_ptr.vmem [resolvable:$true] %s56
      %59 = dma.hbm_to_vmem [thread:$0]  %s8, 64, %s57, [#allocation5]
    $region37: #{tpu_custom_call.1} parent=1 // pred_fallthru
      _
    // Predicated region
    $region38: #{tpu_custom_call.1} parent=1 // pred_check
      _
    $region39: #{tpu_custom_call.1} parent=1 // pred_check_branch
      %61 = sbr.rel (0) target = $region41
    $region40: #{tpu_custom_call.1} parent=1 // pred_region
      _
    $region41: #{tpu_custom_call.1} parent=1 // pred_fallthru
      _
    // Predicated region
    $region42: #{tpu_custom_call.1} parent=1 // pred_check
      _
    $region43: #{tpu_custom_call.1} parent=1 // pred_check_branch
      %63 = sbr.rel (0) target = $region45
    $region44: #{tpu_custom_call.1} parent=1 // pred_region
      _
    $region45: #{tpu_custom_call.1} parent=1 // pred_fallthru
      _
    // Predicated region
    $region46: #{tpu_custom_call.1} parent=1 // pred_check
      _
    $region47: #{tpu_custom_call.1} parent=1 // pred_check_branch
      %65 = sbr.rel (0) target = $region49
    $region48: #{tpu_custom_call.1} parent=1 // pred_region
      %66 = dma.done [#allocation3], 32
    $region49: #{tpu_custom_call.1} parent=1 // pred_fallthru
      _
    // Predicated region
    $region50: #{tpu_custom_call.1} parent=1 // pred_check
      _
    $region51: #{tpu_custom_call.1} parent=1 // pred_check_branch
      %68 = sbr.rel (0) target = $region53
    $region52: #{tpu_custom_call.1} parent=1 // pred_region
      %69 = dma.done [#allocation5], 64
    $region53: #{tpu_custom_call.1} parent=1 // pred_fallthru
      _
    // Predicated region
    $region54: #{tpu_custom_call.1} parent=1 // pred_check
      _
    $region55: #{tpu_custom_call.1} parent=1 // pred_check_branch
      %71 = sbr.rel (0) target = $region57
    $region56: #{tpu_custom_call.1} parent=1 // pred_region
      %72 = dma.done [#allocation5], 64
    $region57: #{tpu_custom_call.1} parent=1 // pred_fallthru
      _
    %v73 = vld [vmem:[%s0] sm:$0xff]
    %v74 = vld [vmem:[%s0 + $0x8] sm:$0xff]
    %v75 = vld [vmem:[%s0 + $0x10] sm:$0xff]
    %v76 = vld [vmem:[%s0 + $0x18] sm:$0xff]
    %v77 = vld [vmem:[%s0 + $0x20] sm:$0xff]
    %v78 = vld [vmem:[%s0 + $0x28] sm:$0xff]
    %v79 = vld [vmem:[%s0 + $0x30] sm:$0xff]
    %v80 = vld [vmem:[%s0 + $0x38] sm:$0xff]
    %v81 = vld [vmem:[%s1] sm:$0xff]
    %v82 = vld [vmem:[%s1 + $0x8] sm:$0xff]
    %v83 = vld [vmem:[%s1 + $0x10] sm:$0xff]
    %v84 = vld [vmem:[%s1 + $0x18] sm:$0xff]
    %v85 = vld [vmem:[%s1 + $0x20] sm:$0xff]
    %v86 = vld [vmem:[%s1 + $0x28] sm:$0xff]
    %v87 = vld [vmem:[%s1 + $0x30] sm:$0xff]
    %v88 = vld [vmem:[%s1 + $0x38] sm:$0xff]
    %v89 = vld [vmem:[%s2] sm:$0xff]
    %v90 = vld [vmem:[%s2 + $0x8] sm:$0xff]
    %v91 = vld [vmem:[%s2 + $0x10] sm:$0xff]
    %v92 = vld [vmem:[%s2 + $0x18] sm:$0xff]
    %v93 = vld [vmem:[#allocation2] sm:$0x1]
    %v94 = vlaneseq
    %v95 = vshrl.u32 %v94, 7
    %v96 = vsub.s32 0, %v95
    %v97 = vrot.slane %v93, %v96
    %vm98 = vcmask 261120
    %v100 = vsel %vm98, %v73, 0
    %v103 = vsel %vm98, %v74, 0
    %v106 = vsel %vm98, %v75, 0
    %v109 = vsel %vm98, %v76, 0
    %v112 = vsel %vm98, %v77, 0
    %v115 = vsel %vm98, %v78, 0
    %v118 = vsel %vm98, %v79, 0
    %v121 = vsel %vm98, %v80, 0
    %123 = vmatprep.subr.mxu0 0.0
    %124 = vmatpush1.msra.mxu0 %v89
    %125 = vmatprep.subr.mxu0 0.0
    %126 = vmatpush1.msra.mxu0 %v90
    %127 = vmatprep.subr.mxu0 0.0
    %128 = vmatpush1.msra.mxu0 %v91
    %129 = vmatprep.subr.mxu0 0.0
    %130 = vmatpush1.msra.mxu0 %v92
    %131 = vmatprep.subr.mxu0 0.0
    %132 = vmatpush1.msra.mxu0 0.0
    %133 = vmatprep.subr.mxu0 0.0
    %134 = vmatpush1.msra.mxu0 0.0
    %135 = vmatprep.subr.mxu0 0.0
    %136 = vmatpush1.msra.mxu0 0.0
    %137 = vmatprep.subr.mxu0 0.0
    %138 = vmatpush1.msra.mxu0 0.0
    %139 = vmatprep.subr.mxu0 0.0
    %140 = vmatpush1.msra.mxu0 0.0
    %141 = vmatprep.subr.mxu0 0.0
    %142 = vmatpush1.msra.mxu0 0.0
    %143 = vmatprep.subr.mxu0 0.0
    %144 = vmatpush1.msra.mxu0 0.0
    %145 = vmatprep.subr.mxu0 0.0
    %146 = vmatpush1.msra.mxu0 0.0
    %147 = vmatprep.subr.mxu0 0.0
    %148 = vmatpush1.msra.mxu0 0.0
    %149 = vmatprep.subr.mxu0 0.0
    %150 = vmatpush1.msra.mxu0 0.0
    %151 = vmatprep.subr.mxu0 0.0
    %152 = vmatpush1.msra.mxu0 0.0
    %153 = vmatprep.subr.mxu0 0.0
    %154 = vmatpush1.msra.mxu0 0.0
    %155 = vmatprep.subr.mxu0 0.0
    %156 = vmatpush1.msra.mxu0 0.0
    %157 = vmatprep.subr.mxu0 0.0
    %158 = vmatpush1.msra.mxu0 0.0
    %159 = vmatprep.subr.mxu0 0.0
    %160 = vmatpush1.msra.mxu0 0.0
    %161 = vmatprep.subr.mxu0 0.0
    %162 = vmatpush1.msra.mxu0 0.0
    %163 = vmatprep.subr.mxu0 0.0
    %164 = vmatpush1.msra.mxu0 0.0
    %165 = vmatprep.subr.mxu0 0.0
    %166 = vmatpush1.msra.mxu0 0.0
    %167 = vmatprep.subr.mxu0 0.0
    %168 = vmatpush1.msra.mxu0 0.0
    %169 = vmatprep.subr.mxu0 0.0
    %170 = vmatpush1.msra.mxu0 0.0
    %171 = vmatprep.subr.mxu0 0.0
    %172 = vmatpush1.msra.mxu0 0.0
    %173 = vmatprep.subr.mxu0 0.0
    %174 = vmatpush1.msra.mxu0 0.0
    %175 = vmatprep.subr.mxu0 0.0
    %176 = vmatpush1.msra.mxu0 0.0
    %177 = vmatprep.subr.mxu0 0.0
    %178 = vmatpush1.msra.mxu0 0.0
    %179 = vmatprep.subr.mxu0 0.0
    %180 = vmatpush1.msra.mxu0 0.0
    %181 = vmatprep.subr.mxu0 0.0
    %182 = vmatpush1.msra.mxu0 0.0
    %183 = vmatprep.subr.mxu0 0.0
    %184 = vmatpush1.msra.mxu0 0.0
    %185 = vmatprep.subr.mxu0 0.0
    %186 = vmatpush1.msra.mxu0 0.0
    %187 = vmatprep.mubr.f32.mxu0 0.0
    %188 = vmatmul.mubr.f32.gmra.mrb[0].mxu0 %v100
    %v189 = vpop.f32.mrb[0].mxu0
    %v190 = vadd.f32 %v97, %v189
    %v191 = vpop.f32.mrb[0].mxu0
    %192 = vmatprep.mubr.f32.mxu0 0.0
    %193 = vmatmul.mubr.f32.gmra.mrb[0].mxu0 %v103
    %v194 = vpop.f32.mrb[0].mxu0
    %v195 = vadd.f32 %v97, %v194
    %v196 = vpop.f32.mrb[0].mxu0
    %197 = vmatprep.mubr.f32.mxu0 0.0
    %198 = vmatmul.mubr.f32.gmra.mrb[0].mxu0 %v106
    %v199 = vpop.f32.mrb[0].mxu0
    %v200 = vadd.f32 %v97, %v199
    %v201 = vpop.f32.mrb[0].mxu0
    %202 = vmatprep.mubr.f32.mxu0 0.0
    %203 = vmatmul.mubr.f32.gmra.mrb[0].mxu0 %v109
    %v204 = vpop.f32.mrb[0].mxu0
    %v205 = vadd.f32 %v97, %v204
    %v206 = vpop.f32.mrb[0].mxu0
    %207 = vmatprep.mubr.f32.mxu0 0.0
    %208 = vmatmul.mubr.f32.gmra.mrb[0].mxu0 %v112
    %v209 = vpop.f32.mrb[0].mxu0
    %v210 = vadd.f32 %v97, %v209
    %v211 = vpop.f32.mrb[0].mxu0
    %212 = vmatprep.mubr.f32.mxu0 0.0
    %213 = vmatmul.mubr.f32.gmra.mrb[0].mxu0 %v115
    %v214 = vpop.f32.mrb[0].mxu0
    %v215 = vadd.f32 %v97, %v214
    %v216 = vpop.f32.mrb[0].mxu0
    %217 = vmatprep.mubr.f32.mxu0 0.0
    %218 = vmatmul.mubr.f32.gmra.mrb[0].mxu0 %v118
    %v219 = vpop.f32.mrb[0].mxu0
    %v220 = vadd.f32 %v97, %v219
    %v221 = vpop.f32.mrb[0].mxu0
    %222 = vmatprep.mubr.f32.mxu0 0.0
    %223 = vmatmul.mubr.f32.gmra.mrb[0].mxu0 %v121
    %v224 = vpop.f32.mrb[0].mxu0
    %v225 = vadd.f32 %v97, %v224
    %v226 = vpop.f32.mrb[0].mxu0
    %227 = vdwg.mxu0
    %v228 = vld [vmem:[%s5] sm:$0xff]
    %v229 = vld [vmem:[%s5 + $0x8] sm:$0xff]
    %v230 = vld [vmem:[%s5 + $0x10] sm:$0xff]
    %v231 = vld [vmem:[%s5 + $0x18] sm:$0xff]
    %232 = vmatprep.subr.mxu0 0.0
    %233 = vmatpush1.msra.mxu0 %v228
    %234 = vmatprep.subr.mxu0 0.0
    %235 = vmatpush1.msra.mxu0 %v229
    %236 = vmatprep.subr.mxu0 0.0
    %237 = vmatpush1.msra.mxu0 %v230
    %238 = vmatprep.subr.mxu0 0.0
    %239 = vmatpush1.msra.mxu0 %v231
    %240 = vmatprep.subr.mxu0 0.0
    %241 = vmatpush1.msra.mxu0 0.0
    %242 = vmatprep.subr.mxu0 0.0
    %243 = vmatpush1.msra.mxu0 0.0
    %244 = vmatprep.subr.mxu0 0.0
    %245 = vmatpush1.msra.mxu0 0.0
    %246 = vmatprep.subr.mxu0 0.0
    %247 = vmatpush1.msra.mxu0 0.0
    %248 = vmatprep.subr.mxu0 0.0
    %249 = vmatpush1.msra.mxu0 0.0
    %250 = vmatprep.subr.mxu0 0.0
    %251 = vmatpush1.msra.mxu0 0.0
    %252 = vmatprep.subr.mxu0 0.0
    %253 = vmatpush1.msra.mxu0 0.0
    %254 = vmatprep.subr.mxu0 0.0
    %255 = vmatpush1.msra.mxu0 0.0
    %256 = vmatprep.subr.mxu0 0.0
    %257 = vmatpush1.msra.mxu0 0.0
    %258 = vmatprep.subr.mxu0 0.0
    %259 = vmatpush1.msra.mxu0 0.0
    %260 = vmatprep.subr.mxu0 0.0
    %261 = vmatpush1.msra.mxu0 0.0
    %262 = vmatprep.subr.mxu0 0.0
    %263 = vmatpush1.msra.mxu0 0.0
    %264 = vmatprep.subr.mxu0 0.0
    %265 = vmatpush1.msra.mxu0 0.0
    %266 = vmatprep.subr.mxu0 0.0
    %267 = vmatpush1.msra.mxu0 0.0
    %268 = vmatprep.subr.mxu0 0.0
    %269 = vmatpush1.msra.mxu0 0.0
    %270 = vmatprep.subr.mxu0 0.0
    %271 = vmatpush1.msra.mxu0 0.0
    %272 = vmatprep.subr.mxu0 0.0
    %273 = vmatpush1.msra.mxu0 0.0
    %274 = vmatprep.subr.mxu0 0.0
    %275 = vmatpush1.msra.mxu0 0.0
    %276 = vmatprep.subr.mxu0 0.0
    %277 = vmatpush1.msra.mxu0 0.0
    %278 = vmatprep.subr.mxu0 0.0
    %279 = vmatpush1.msra.mxu0 0.0
    %280 = vmatprep.subr.mxu0 0.0
    %281 = vmatpush1.msra.mxu0 0.0
    %282 = vmatprep.subr.mxu0 0.0
    %283 = vmatpush1.msra.mxu0 0.0
    %284 = vmatprep.subr.mxu0 0.0
    %285 = vmatpush1.msra.mxu0 0.0
    %286 = vmatprep.subr.mxu0 0.0
    %287 = vmatpush1.msra.mxu0 0.0
    %288 = vmatprep.subr.mxu0 0.0
    %289 = vmatpush1.msra.mxu0 0.0
    %290 = vmatprep.subr.mxu0 0.0
    %291 = vmatpush1.msra.mxu0 0.0
    %292 = vmatprep.subr.mxu0 0.0
    %293 = vmatpush1.msra.mxu0 0.0
    %294 = vmatprep.subr.mxu0 0.0
    %295 = vmatpush1.msra.mxu0 0.0
    %296 = vmatprep.mubr.f32.mxu0 0.0
    %297 = vmatmul.mubr.f32.gmra.mrb[0].mxu0 %v100
    %v298 = vpop.f32.mrb[0].mxu0
    %v299 = vadd.f32 0.0, %v298
    %v300 = vpop.f32.mrb[0].mxu0
    %301 = vmatprep.mubr.f32.mxu0 0.0
    %302 = vmatmul.mubr.f32.gmra.mrb[0].mxu0 %v103
    %v303 = vpop.f32.mrb[0].mxu0
    %v304 = vadd.f32 0.0, %v303
    %v305 = vpop.f32.mrb[0].mxu0
    %306 = vmatprep.mubr.f32.mxu0 0.0
    %307 = vmatmul.mubr.f32.gmra.mrb[0].mxu0 %v106
    %v308 = vpop.f32.mrb[0].mxu0
    %v309 = vadd.f32 0.0, %v308
    %v310 = vpop.f32.mrb[0].mxu0
    %311 = vmatprep.mubr.f32.mxu0 0.0
    %312 = vmatmul.mubr.f32.gmra.mrb[0].mxu0 %v109
    %v313 = vpop.f32.mrb[0].mxu0
    %v314 = vadd.f32 0.0, %v313
    %v315 = vpop.f32.mrb[0].mxu0
    %316 = vmatprep.mubr.f32.mxu0 0.0
    %317 = vmatmul.mubr.f32.gmra.mrb[0].mxu0 %v112
    %v318 = vpop.f32.mrb[0].mxu0
    %v319 = vadd.f32 0.0, %v318
    %v320 = vpop.f32.mrb[0].mxu0
    %321 = vmatprep.mubr.f32.mxu0 0.0
    %322 = vmatmul.mubr.f32.gmra.mrb[0].mxu0 %v115
    %v323 = vpop.f32.mrb[0].mxu0
    %v324 = vadd.f32 0.0, %v323
    %v325 = vpop.f32.mrb[0].mxu0
    %326 = vmatprep.mubr.f32.mxu0 0.0
    %327 = vmatmul.mubr.f32.gmra.mrb[0].mxu0 %v118
    %v328 = vpop.f32.mrb[0].mxu0
    %v329 = vadd.f32 0.0, %v328
    %v330 = vpop.f32.mrb[0].mxu0
    %331 = vmatprep.mubr.f32.mxu0 0.0
    %332 = vmatmul.mubr.f32.gmra.mrb[0].mxu0 %v121
    %v333 = vpop.f32.mrb[0].mxu0
    %v334 = vadd.f32 0.0, %v333
    %v335 = vpop.f32.mrb[0].mxu0
    %336 = vdwg.mxu0
    %v337 = vld [vmem:[#allocation4 + $0x1] sm:$0x1]
    %v338 = vlaneseq
    %v339 = vshrl.u32 %v338, 7
    %v340 = vsub.s32 0, %v339
    %v341 = vrot.slane %v337, %v340
    %v342 = vmul.f32 %v299, %v341
    %v343 = vmul.f32 %v304, %v341
    %v344 = vmul.f32 %v309, %v341
    %v345 = vmul.f32 %v314, %v341
    %v346 = vmul.f32 %v319, %v341
    %v347 = vmul.f32 %v324, %v341
    %v348 = vmul.f32 %v329, %v341
    %v349 = vmul.f32 %v334, %v341
    %v350 = vld [vmem:[#allocation4] sm:$0x1]
    %v351 = vlaneseq
    %v352 = vshrl.u32 %v351, 7
    %v353 = vsub.s32 0, %v352
    %v354 = vrot.slane %v350, %v353
    %v355 = vmul.f32 %v299, %v354
    %v356 = vmul.f32 %v304, %v354
    %v357 = vmul.f32 %v309, %v354
    %v358 = vmul.f32 %v314, %v354
    %v359 = vmul.f32 %v319, %v354
    %v360 = vmul.f32 %v324, %v354
    %v361 = vmul.f32 %v329, %v354
    %v362 = vmul.f32 %v334, %v354
    %vm363 = vcmask 130048
    %v365 = vsel %vm363, 1.0, 0
    %v368 = vsel %vm363, %v355, 0
    %v371 = vsel %vm363, %v356, 0
    %v374 = vsel %vm363, %v357, 0
    %v377 = vsel %vm363, %v358, 0
    %v380 = vsel %vm363, %v359, 0
    %v383 = vsel %vm363, %v360, 0
    %v386 = vsel %vm363, %v361, 0
    %v389 = vsel %vm363, %v362, 0
    %391 = vmatprep.subr.mxu0 0.0
    %392 = vmatpush1.xpose.msra.mxu0 %v368
    %393 = vmatprep.subr.mxu0 0.0
    %394 = vmatpush1.xpose.msra.mxu0 %v371
    %395 = vmatprep.subr.mxu0 0.0
    %396 = vmatpush1.xpose.msra.mxu0 %v374
    %397 = vmatprep.subr.mxu0 0.0
    %398 = vmatpush1.xpose.msra.mxu0 %v377
    %399 = vmatprep.subr.mxu0 0.0
    %400 = vmatpush1.xpose.msra.mxu0 %v380
    %401 = vmatprep.subr.mxu0 0.0
    %402 = vmatpush1.xpose.msra.mxu0 %v383
    %403 = vmatprep.subr.mxu0 0.0
    %404 = vmatpush1.xpose.msra.mxu0 %v386
    %405 = vmatprep.subr.mxu0 0.0
    %406 = vmatpush1.xpose.msra.mxu0 %v389
    %407 = vmatprep.subr.mxu0 0.0
    %408 = vmatpush1.xpose.msra.mxu0 0.0
    %409 = vmatprep.subr.mxu0 0.0
    %410 = vmatpush1.xpose.msra.mxu0 0.0
    %411 = vmatprep.subr.mxu0 0.0
    %412 = vmatpush1.xpose.msra.mxu0 0.0
    %413 = vmatprep.subr.mxu0 0.0
    %414 = vmatpush1.xpose.msra.mxu0 0.0
    %415 = vmatprep.subr.mxu0 0.0
    %416 = vmatpush1.xpose.msra.mxu0 0.0
    %417 = vmatprep.subr.mxu0 0.0
    %418 = vmatpush1.xpose.msra.mxu0 0.0
    %419 = vmatprep.subr.mxu0 0.0
    %420 = vmatpush1.xpose.msra.mxu0 0.0
    %421 = vmatprep.subr.mxu0 0.0
    %422 = vmatpush1.xpose.msra.mxu0 0.0
    %423 = vmatprep.subr.mxu0 0.0
    %424 = vmatpush1.xpose.msra.mxu0 0.0
    %425 = vmatprep.subr.mxu0 0.0
    %426 = vmatpush1.xpose.msra.mxu0 0.0
    %427 = vmatprep.subr.mxu0 0.0
    %428 = vmatpush1.xpose.msra.mxu0 0.0
    %429 = vmatprep.subr.mxu0 0.0
    %430 = vmatpush1.xpose.msra.mxu0 0.0
    %431 = vmatprep.subr.mxu0 0.0
    %432 = vmatpush1.xpose.msra.mxu0 0.0
    %433 = vmatprep.subr.mxu0 0.0
    %434 = vmatpush1.xpose.msra.mxu0 0.0
    %435 = vmatprep.subr.mxu0 0.0
    %436 = vmatpush1.xpose.msra.mxu0 0.0
    %437 = vmatprep.subr.mxu0 0.0
    %438 = vmatpush1.xpose.msra.mxu0 0.0
    %439 = vmatprep.subr.mxu0 0.0
    %440 = vmatpush1.xpose.msra.mxu0 0.0
    %441 = vmatprep.subr.mxu0 0.0
    %442 = vmatpush1.xpose.msra.mxu0 0.0
    %443 = vmatprep.subr.mxu0 0.0
    %444 = vmatpush1.xpose.msra.mxu0 0.0
    %445 = vmatprep.subr.mxu0 0.0
    %446 = vmatpush1.xpose.msra.mxu0 0.0
    %447 = vmatprep.subr.mxu0 0.0
    %448 = vmatpush1.xpose.msra.mxu0 0.0
    %449 = vmatprep.subr.mxu0 0.0
    %450 = vmatpush1.xpose.msra.mxu0 0.0
    %451 = vmatprep.subr.mxu0 0.0
    %452 = vmatpush1.xpose.msra.mxu0 0.0
    %453 = vmatprep.subr.mxu0 0.0
    %454 = vmatpush1.xpose.msra.mxu0 0.0
    %455 = vmatprep.mubr.f32.mxu0 0.0
    %456 = vmatmul.mubr.f32.gmra.mrb[0].mxu0 %v365
    %v457 = vpop.f32.mrb[0].mxu0
    %v458 = vadd.f32 0.0, %v457
    %v459 = vpop.f32.mrb[0].mxu0
    %460 = vmatprep.mubr.f32.mxu0 0.0
    %461 = vmatmul.mubr.f32.gmra.mrb[0].mxu0 %v365
    %v462 = vpop.f32.mrb[0].mxu0
    %v463 = vadd.f32 0.0, %v462
    %v464 = vpop.f32.mrb[0].mxu0
    %465 = vmatprep.mubr.f32.mxu0 0.0
    %466 = vmatmul.mubr.f32.gmra.mrb[0].mxu0 %v365
    %v467 = vpop.f32.mrb[0].mxu0
    %v468 = vadd.f32 0.0, %v467
    %v469 = vpop.f32.mrb[0].mxu0
    %470 = vmatprep.mubr.f32.mxu0 0.0
    %471 = vmatmul.mubr.f32.gmra.mrb[0].mxu0 %v365
    %v472 = vpop.f32.mrb[0].mxu0
    %v473 = vadd.f32 0.0, %v472
    %v474 = vpop.f32.mrb[0].mxu0
    %475 = vmatprep.mubr.f32.mxu0 0.0
    %476 = vmatmul.mubr.f32.gmra.mrb[0].mxu0 %v365
    %v477 = vpop.f32.mrb[0].mxu0
    %v478 = vadd.f32 0.0, %v477
    %v479 = vpop.f32.mrb[0].mxu0
    %480 = vmatprep.mubr.f32.mxu0 0.0
    %481 = vmatmul.mubr.f32.gmra.mrb[0].mxu0 %v365
    %v482 = vpop.f32.mrb[0].mxu0
    %v483 = vadd.f32 0.0, %v482
    %v484 = vpop.f32.mrb[0].mxu0
    %485 = vmatprep.mubr.f32.mxu0 0.0
    %486 = vmatmul.mubr.f32.gmra.mrb[0].mxu0 %v365
    %v487 = vpop.f32.mrb[0].mxu0
    %v488 = vadd.f32 0.0, %v487
    %v489 = vpop.f32.mrb[0].mxu0
    %490 = vmatprep.mubr.f32.mxu0 0.0
    %491 = vmatmul.mubr.f32.gmra.mrb[0].mxu0 %v365
    %v492 = vpop.f32.mrb[0].mxu0
    %v493 = vadd.f32 0.0, %v492
    %v494 = vpop.f32.mrb[0].mxu0
    %495 = vdwg.mxu0
    %v497 = vsel %vm363, %v342, 0
    %v500 = vsel %vm363, %v343, 0
    %v503 = vsel %vm363, %v344, 0
    %v506 = vsel %vm363, %v345, 0
    %v509 = vsel %vm363, %v346, 0
    %v512 = vsel %vm363, %v347, 0
    %v515 = vsel %vm363, %v348, 0
    %v518 = vsel %vm363, %v349, 0
    %520 = vmatprep.subr.mxu0 0.0
    %521 = vmatpush1.xpose.msra.mxu0 %v365
    %522 = vmatprep.subr.mxu0 0.0
    %523 = vmatpush1.xpose.msra.mxu0 %v365
    %524 = vmatprep.subr.mxu0 0.0
    %525 = vmatpush1.xpose.msra.mxu0 %v365
    %526 = vmatprep.subr.mxu0 0.0
    %527 = vmatpush1.xpose.msra.mxu0 %v365
    %528 = vmatprep.subr.mxu0 0.0
    %529 = vmatpush1.xpose.msra.mxu0 %v365
    %530 = vmatprep.subr.mxu0 0.0
    %531 = vmatpush1.xpose.msra.mxu0 %v365
    %532 = vmatprep.subr.mxu0 0.0
    %533 = vmatpush1.xpose.msra.mxu0 %v365
    %534 = vmatprep.subr.mxu0 0.0
    %535 = vmatpush1.xpose.msra.mxu0 %v365
    %536 = vmatprep.subr.mxu0 0.0
    %537 = vmatpush1.xpose.msra.mxu0 0.0
    %538 = vmatprep.subr.mxu0 0.0
    %539 = vmatpush1.xpose.msra.mxu0 0.0
    %540 = vmatprep.subr.mxu0 0.0
    %541 = vmatpush1.xpose.msra.mxu0 0.0
    %542 = vmatprep.subr.mxu0 0.0
    %543 = vmatpush1.xpose.msra.mxu0 0.0
    %544 = vmatprep.subr.mxu0 0.0
    %545 = vmatpush1.xpose.msra.mxu0 0.0
    %546 = vmatprep.subr.mxu0 0.0
    %547 = vmatpush1.xpose.msra.mxu0 0.0
    %548 = vmatprep.subr.mxu0 0.0
    %549 = vmatpush1.xpose.msra.mxu0 0.0
    %550 = vmatprep.subr.mxu0 0.0
    %551 = vmatpush1.xpose.msra.mxu0 0.0
    %552 = vmatprep.subr.mxu0 0.0
    %553 = vmatpush1.xpose.msra.mxu0 0.0
    %554 = vmatprep.subr.mxu0 0.0
    %555 = vmatpush1.xpose.msra.mxu0 0.0
    %556 = vmatprep.subr.mxu0 0.0
    %557 = vmatpush1.xpose.msra.mxu0 0.0
    %558 = vmatprep.subr.mxu0 0.0
    %559 = vmatpush1.xpose.msra.mxu0 0.0
    %560 = vmatprep.subr.mxu0 0.0
    %561 = vmatpush1.xpose.msra.mxu0 0.0
    %562 = vmatprep.subr.mxu0 0.0
    %563 = vmatpush1.xpose.msra.mxu0 0.0
    %564 = vmatprep.subr.mxu0 0.0
    %565 = vmatpush1.xpose.msra.mxu0 0.0
    %566 = vmatprep.subr.mxu0 0.0
    %567 = vmatpush1.xpose.msra.mxu0 0.0
    %568 = vmatprep.subr.mxu0 0.0
    %569 = vmatpush1.xpose.msra.mxu0 0.0
    %570 = vmatprep.subr.mxu0 0.0
    %571 = vmatpush1.xpose.msra.mxu0 0.0
    %572 = vmatprep.subr.mxu0 0.0
    %573 = vmatpush1.xpose.msra.mxu0 0.0
    %574 = vmatprep.subr.mxu0 0.0
    %575 = vmatpush1.xpose.msra.mxu0 0.0
    %576 = vmatprep.subr.mxu0 0.0
    %577 = vmatpush1.xpose.msra.mxu0 0.0
    %578 = vmatprep.subr.mxu0 0.0
    %579 = vmatpush1.xpose.msra.mxu0 0.0
    %580 = vmatprep.subr.mxu0 0.0
    %581 = vmatpush1.xpose.msra.mxu0 0.0
    %582 = vmatprep.subr.mxu0 0.0
    %583 = vmatpush1.xpose.msra.mxu0 0.0
    %584 = vmatprep.mubr.f32.mxu0 0.0
    %585 = vmatmul.mubr.f32.gmra.mrb[0].mxu0 %v497
    %v586 = vpop.f32.mrb[0].mxu0
    %v587 = vadd.f32 %v458, %v586
    %v588 = vpop.f32.mrb[0].mxu0
    %589 = vmatprep.mubr.f32.mxu0 0.0
    %590 = vmatmul.mubr.f32.gmra.mrb[0].mxu0 %v500
    %v591 = vpop.f32.mrb[0].mxu0
    %v592 = vadd.f32 %v463, %v591
    %v593 = vpop.f32.mrb[0].mxu0
    %594 = vmatprep.mubr.f32.mxu0 0.0
    %595 = vmatmul.mubr.f32.gmra.mrb[0].mxu0 %v503
    %v596 = vpop.f32.mrb[0].mxu0
    %v597 = vadd.f32 %v468, %v596
    %v598 = vpop.f32.mrb[0].mxu0
    %599 = vmatprep.mubr.f32.mxu0 0.0
    %600 = vmatmul.mubr.f32.gmra.mrb[0].mxu0 %v506
    %v601 = vpop.f32.mrb[0].mxu0
    %v602 = vadd.f32 %v473, %v601
    %v603 = vpop.f32.mrb[0].mxu0
    %604 = vmatprep.mubr.f32.mxu0 0.0
    %605 = vmatmul.mubr.f32.gmra.mrb[0].mxu0 %v509
    %v606 = vpop.f32.mrb[0].mxu0
    %v607 = vadd.f32 %v478, %v606
    %v608 = vpop.f32.mrb[0].mxu0
    %609 = vmatprep.mubr.f32.mxu0 0.0
    %610 = vmatmul.mubr.f32.gmra.mrb[0].mxu0 %v512
    %v611 = vpop.f32.mrb[0].mxu0
    %v612 = vadd.f32 %v483, %v611
    %v613 = vpop.f32.mrb[0].mxu0
    %614 = vmatprep.mubr.f32.mxu0 0.0
    %615 = vmatmul.mubr.f32.gmra.mrb[0].mxu0 %v515
    %v616 = vpop.f32.mrb[0].mxu0
    %v617 = vadd.f32 %v488, %v616
    %v618 = vpop.f32.mrb[0].mxu0
    %619 = vmatprep.mubr.f32.mxu0 0.0
    %620 = vmatmul.mubr.f32.gmra.mrb[0].mxu0 %v518
    %v621 = vpop.f32.mrb[0].mxu0
    %v622 = vadd.f32 %v493, %v621
    %v623 = vpop.f32.mrb[0].mxu0
    %624 = vdwg.mxu0
    %vm625 = vcmp.ge.f32.partialorder %v587, 0.0
    %vm626 = vcmp.ge.f32.partialorder %v592, 0.0
    %vm627 = vcmp.ge.f32.partialorder %v597, 0.0
    %vm628 = vcmp.ge.f32.partialorder %v602, 0.0
    %vm629 = vcmp.ge.f32.partialorder %v607, 0.0
    %vm630 = vcmp.ge.f32.partialorder %v612, 0.0
    %vm631 = vcmp.ge.f32.partialorder %v617, 0.0
    %vm632 = vcmp.ge.f32.partialorder %v622, 0.0
    %v633 = vmul.f32 %v587, 0.2
    %v634 = vmul.f32 %v592, 0.2
    %v635 = vmul.f32 %v597, 0.2
    %v636 = vmul.f32 %v602, 0.2
    %v637 = vmul.f32 %v607, 0.2
    %v638 = vmul.f32 %v612, 0.2
    %v639 = vmul.f32 %v617, 0.2
    %v640 = vmul.f32 %v622, 0.2
    %v641 = vsel %vm625, %v587, %v633
    %v642 = vsel %vm626, %v592, %v634
    %v643 = vsel %vm627, %v597, %v635
    %v644 = vsel %vm628, %v602, %v636
    %v645 = vsel %vm629, %v607, %v637
    %v646 = vsel %vm630, %v612, %v638
    %v647 = vsel %vm631, %v617, %v639
    %v648 = vsel %vm632, %v622, %v640
    %vm649 = vcmp.gt.f32.partialorder %v81, 0.0
    %vm650 = vcmp.gt.f32.partialorder %v82, 0.0
    %vm651 = vcmp.gt.f32.partialorder %v83, 0.0
    %vm652 = vcmp.gt.f32.partialorder %v84, 0.0
    %vm653 = vcmp.gt.f32.partialorder %v85, 0.0
    %vm654 = vcmp.gt.f32.partialorder %v86, 0.0
    %vm655 = vcmp.gt.f32.partialorder %v87, 0.0
    %vm656 = vcmp.gt.f32.partialorder %v88, 0.0
    %v657 = vsel %vm649, %v641, -1e+30
    %v658 = vsel %vm650, %v642, -1e+30
    %v659 = vsel %vm651, %v643, -1e+30
    %v660 = vsel %vm652, %v644, -1e+30
    %v661 = vsel %vm653, %v645, -1e+30
    %v662 = vsel %vm654, %v646, -1e+30
    %v663 = vsel %vm655, %v647, -1e+30
    %v664 = vsel %vm656, %v648, -1e+30
    %vm665 = vcmask 523264
    %v666 = vsel %vm665, %v657, -inf
    %667 = vmax.xlane.f32.xlu0 %v666
    %v668 = vpop.xlane.xlu0 %667
    %v669 = vsel %vm665, %v658, -inf
    %670 = vmax.xlane.f32.xlu0 %v669
    %v671 = vpop.xlane.xlu0 %670
    %v672 = vsel %vm665, %v659, -inf
    %673 = vmax.xlane.f32.xlu0 %v672
    %v674 = vpop.xlane.xlu0 %673
    %v675 = vsel %vm665, %v660, -inf
    %676 = vmax.xlane.f32.xlu0 %v675
    %v677 = vpop.xlane.xlu0 %676
    %v678 = vsel %vm665, %v661, -inf
    %679 = vmax.xlane.f32.xlu0 %v678
    %v680 = vpop.xlane.xlu0 %679
    %v681 = vsel %vm665, %v662, -inf
    %682 = vmax.xlane.f32.xlu0 %v681
    %v683 = vpop.xlane.xlu0 %682
    %v684 = vsel %vm665, %v663, -inf
    %685 = vmax.xlane.f32.xlu0 %v684
    %v686 = vpop.xlane.xlu0 %685
    %v687 = vsel %vm665, %v664, -inf
    %688 = vmax.xlane.f32.xlu0 %v687
    %v689 = vpop.xlane.xlu0 %688
    %v690 = vsub.f32 %v657, %v668
    %v691 = vsub.f32 %v658, %v671
    %v692 = vsub.f32 %v659, %v674
    %v693 = vsub.f32 %v660, %v677
    %v694 = vsub.f32 %v661, %v680
    %v695 = vsub.f32 %v662, %v683
    %v696 = vsub.f32 %v663, %v686
    %v697 = vsub.f32 %v664, %v689
    %v698 = vmul.f32 %v690, 1.442695
    %v699 = vpow.pop %v698
    %v700 = vmul.f32 %v691, 1.442695
    %v701 = vpow.pop %v700
    %v702 = vmul.f32 %v692, 1.442695
    %v703 = vpow.pop %v702
    %v704 = vmul.f32 %v693, 1.442695
    %v705 = vpow.pop %v704
    %v706 = vmul.f32 %v694, 1.442695
    %v707 = vpow.pop %v706
    %v708 = vmul.f32 %v695, 1.442695
    %v709 = vpow.pop %v708
    %v710 = vmul.f32 %v696, 1.442695
    %v711 = vpow.pop %v710
    %v712 = vmul.f32 %v697, 1.442695
    %v713 = vpow.pop %v712
    %v714 = vsel %vm665, %v699, 0.0
    %715 = vadd.xlane.f32.xlu0 %v714
    %v716 = vpop.xlane.xlu0 %715
    %v717 = vsel %vm665, %v701, 0.0
    %718 = vadd.xlane.f32.xlu0 %v717
    %v719 = vpop.xlane.xlu0 %718
    %v720 = vsel %vm665, %v703, 0.0
    %721 = vadd.xlane.f32.xlu0 %v720
    %v722 = vpop.xlane.xlu0 %721
    %v723 = vsel %vm665, %v705, 0.0
    %724 = vadd.xlane.f32.xlu0 %v723
    %v725 = vpop.xlane.xlu0 %724
    %v726 = vsel %vm665, %v707, 0.0
    %727 = vadd.xlane.f32.xlu0 %v726
    %v728 = vpop.xlane.xlu0 %727
    %v729 = vsel %vm665, %v709, 0.0
    %730 = vadd.xlane.f32.xlu0 %v729
    %v731 = vpop.xlane.xlu0 %730
    %v732 = vsel %vm665, %v711, 0.0
    %733 = vadd.xlane.f32.xlu0 %v732
    %v734 = vpop.xlane.xlu0 %733
    %v735 = vsel %vm665, %v713, 0.0
    %736 = vadd.xlane.f32.xlu0 %v735
    %v737 = vpop.xlane.xlu0 %736
    %v738 = vrcp.pop %v716
    %v739 = vrcp.pop %v719
    %v740 = vrcp.pop %v722
    %v741 = vrcp.pop %v725
    %v742 = vrcp.pop %v728
    %v743 = vrcp.pop %v731
    %v744 = vrcp.pop %v734
    %v745 = vrcp.pop %v737
    %v746 = vmul.f32 %v699, %v738
    %v747 = vmul.f32 %v701, %v739
    %v748 = vmul.f32 %v703, %v740
    %v749 = vmul.f32 %v705, %v741
    %v750 = vmul.f32 %v707, %v742
    %v751 = vmul.f32 %v709, %v743
    %v752 = vmul.f32 %v711, %v744
    %v753 = vmul.f32 %v713, %v745
    %v754 = vld [vmem:[#allocation4 + $0x2] sm:$0x1]
    %v755 = vlaneseq
    %v756 = vshrl.u32 %v755, 7
    %v757 = vsub.s32 0, %v756
    %v758 = vrot.slane %v754, %v757
    %v760 = vsel %vm665, %v746, 0
    %v763 = vsel %vm665, %v747, 0
    %v766 = vsel %vm665, %v748, 0
    %v769 = vsel %vm665, %v749, 0
    %v772 = vsel %vm665, %v750, 0
    %v775 = vsel %vm665, %v751, 0
    %v778 = vsel %vm665, %v752, 0
    %v781 = vsel %vm665, %v753, 0
    %783 = vmatprep.subr.mxu0 0.0
    %784 = vmatpush1.msra.mxu0 %v299
    %785 = vmatprep.subr.mxu0 0.0
    %786 = vmatpush1.msra.mxu0 %v304
    %787 = vmatprep.subr.mxu0 0.0
    %788 = vmatpush1.msra.mxu0 %v309
    %789 = vmatprep.subr.mxu0 0.0
    %790 = vmatpush1.msra.mxu0 %v314
    %791 = vmatprep.subr.mxu0 0.0
    %792 = vmatpush1.msra.mxu0 %v319
    %793 = vmatprep.subr.mxu0 0.0
    %794 = vmatpush1.msra.mxu0 %v324
    %795 = vmatprep.subr.mxu0 0.0
    %796 = vmatpush1.msra.mxu0 %v329
    %797 = vmatprep.subr.mxu0 0.0
    %798 = vmatpush1.msra.mxu0 %v334
    %799 = vmatprep.subr.mxu0 0.0
    %800 = vmatpush1.msra.mxu0 0.0
    %801 = vmatprep.subr.mxu0 0.0
    %802 = vmatpush1.msra.mxu0 0.0
    %803 = vmatprep.subr.mxu0 0.0
    %804 = vmatpush1.msra.mxu0 0.0
    %805 = vmatprep.subr.mxu0 0.0
    %806 = vmatpush1.msra.mxu0 0.0
    %807 = vmatprep.subr.mxu0 0.0
    %808 = vmatpush1.msra.mxu0 0.0
    %809 = vmatprep.subr.mxu0 0.0
    %810 = vmatpush1.msra.mxu0 0.0
    %811 = vmatprep.subr.mxu0 0.0
    %812 = vmatpush1.msra.mxu0 0.0
    %813 = vmatprep.subr.mxu0 0.0
    %814 = vmatpush1.msra.mxu0 0.0
    %815 = vmatprep.subr.mxu0 0.0
    %816 = vmatpush1.msra.mxu0 0.0
    %817 = vmatprep.subr.mxu0 0.0
    %818 = vmatpush1.msra.mxu0 0.0
    %819 = vmatprep.subr.mxu0 0.0
    %820 = vmatpush1.msra.mxu0 0.0
    %821 = vmatprep.subr.mxu0 0.0
    %822 = vmatpush1.msra.mxu0 0.0
    %823 = vmatprep.subr.mxu0 0.0
    %824 = vmatpush1.msra.mxu0 0.0
    %825 = vmatprep.subr.mxu0 0.0
    %826 = vmatpush1.msra.mxu0 0.0
    %827 = vmatprep.subr.mxu0 0.0
    %828 = vmatpush1.msra.mxu0 0.0
    %829 = vmatprep.subr.mxu0 0.0
    %830 = vmatpush1.msra.mxu0 0.0
    %831 = vmatprep.subr.mxu0 0.0
    %832 = vmatpush1.msra.mxu0 0.0
    %833 = vmatprep.subr.mxu0 0.0
    %834 = vmatpush1.msra.mxu0 0.0
    %835 = vmatprep.subr.mxu0 0.0
    %836 = vmatpush1.msra.mxu0 0.0
    %837 = vmatprep.subr.mxu0 0.0
    %838 = vmatpush1.msra.mxu0 0.0
    %839 = vmatprep.subr.mxu0 0.0
    %840 = vmatpush1.msra.mxu0 0.0
    %841 = vmatprep.subr.mxu0 0.0
    %842 = vmatpush1.msra.mxu0 0.0
    %843 = vmatprep.subr.mxu0 0.0
    %844 = vmatpush1.msra.mxu0 0.0
    %845 = vmatprep.subr.mxu0 0.0
    %846 = vmatpush1.msra.mxu0 0.0
    %847 = vmatprep.mubr.f32.mxu0 0.0
    %848 = vmatmul.mubr.f32.gmra.mrb[0].mxu0 %v760
    %v849 = vpop.f32.mrb[0].mxu0
    %v850 = vadd.f32 %v758, %v849
    %v851 = vpop.f32.mrb[0].mxu0
    %852 = vmatprep.mubr.f32.mxu0 0.0
    %853 = vmatmul.mubr.f32.gmra.mrb[0].mxu0 %v763
    %v854 = vpop.f32.mrb[0].mxu0
    %v855 = vadd.f32 %v758, %v854
    %v856 = vpop.f32.mrb[0].mxu0
    %857 = vmatprep.mubr.f32.mxu0 0.0
    %858 = vmatmul.mubr.f32.gmra.mrb[0].mxu0 %v766
    %v859 = vpop.f32.mrb[0].mxu0
    %v860 = vadd.f32 %v758, %v859
    %v861 = vpop.f32.mrb[0].mxu0
    %862 = vmatprep.mubr.f32.mxu0 0.0
    %863 = vmatmul.mubr.f32.gmra.mrb[0].mxu0 %v769
    %v864 = vpop.f32.mrb[0].mxu0
    %v865 = vadd.f32 %v758, %v864
    %v866 = vpop.f32.mrb[0].mxu0
    %867 = vmatprep.mubr.f32.mxu0 0.0
    %868 = vmatmul.mubr.f32.gmra.mrb[0].mxu0 %v772
    %v869 = vpop.f32.mrb[0].mxu0
    %v870 = vadd.f32 %v758, %v869
    %v871 = vpop.f32.mrb[0].mxu0
    %872 = vmatprep.mubr.f32.mxu0 0.0
    %873 = vmatmul.mubr.f32.gmra.mrb[0].mxu0 %v775
    %v874 = vpop.f32.mrb[0].mxu0
    %v875 = vadd.f32 %v758, %v874
    %v876 = vpop.f32.mrb[0].mxu0
    %877 = vmatprep.mubr.f32.mxu0 0.0
    %878 = vmatmul.mubr.f32.gmra.mrb[0].mxu0 %v778
    %v879 = vpop.f32.mrb[0].mxu0
    %v880 = vadd.f32 %v758, %v879
    %v881 = vpop.f32.mrb[0].mxu0
    %882 = vmatprep.mubr.f32.mxu0 0.0
    %883 = vmatmul.mubr.f32.gmra.mrb[0].mxu0 %v781
    %v884 = vpop.f32.mrb[0].mxu0
    %v885 = vadd.f32 %v758, %v884
    %v886 = vpop.f32.mrb[0].mxu0
    %887 = vdwg.mxu0
    %v888 = vmax.f32 %v850, 0.0
    %v889 = vmax.f32 %v855, 0.0
    %v890 = vmax.f32 %v860, 0.0
    %v891 = vmax.f32 %v865, 0.0
    %v892 = vmax.f32 %v870, 0.0
    %v893 = vmax.f32 %v875, 0.0
    %v894 = vmax.f32 %v880, 0.0
    %v895 = vmax.f32 %v885, 0.0
    %v896 = vld [vmem:[%s7] sm:$0xff]
    %v897 = vld [vmem:[%s7 + $0x8] sm:$0xff]
    %v899 = vsel %vm363, %v888, 0
    %v902 = vsel %vm363, %v889, 0
    %v905 = vsel %vm363, %v890, 0
    %v908 = vsel %vm363, %v891, 0
    %v911 = vsel %vm363, %v892, 0
    %v914 = vsel %vm363, %v893, 0
    %v917 = vsel %vm363, %v894, 0
    %v920 = vsel %vm363, %v895, 0
    %922 = vmatprep.subr.mxu0 0.0
    %923 = vmatpush1.msra.mxu0 %v896
    %924 = vmatprep.subr.mxu0 0.0
    %925 = vmatpush1.msra.mxu0 %v897
    %926 = vmatprep.subr.mxu0 0.0
    %927 = vmatpush1.msra.mxu0 0.0
    %928 = vmatprep.subr.mxu0 0.0
    %929 = vmatpush1.msra.mxu0 0.0
    %930 = vmatprep.subr.mxu0 0.0
    %931 = vmatpush1.msra.mxu0 0.0
    %932 = vmatprep.subr.mxu0 0.0
    %933 = vmatpush1.msra.mxu0 0.0
    %934 = vmatprep.subr.mxu0 0.0
    %935 = vmatpush1.msra.mxu0 0.0
    %936 = vmatprep.subr.mxu0 0.0
    %937 = vmatpush1.msra.mxu0 0.0
    %938 = vmatprep.subr.mxu0 0.0
    %939 = vmatpush1.msra.mxu0 0.0
    %940 = vmatprep.subr.mxu0 0.0
    %941 = vmatpush1.msra.mxu0 0.0
    %942 = vmatprep.subr.mxu0 0.0
    %943 = vmatpush1.msra.mxu0 0.0
    %944 = vmatprep.subr.mxu0 0.0
    %945 = vmatpush1.msra.mxu0 0.0
    %946 = vmatprep.subr.mxu0 0.0
    %947 = vmatpush1.msra.mxu0 0.0
    %948 = vmatprep.subr.mxu0 0.0
    %949 = vmatpush1.msra.mxu0 0.0
    %950 = vmatprep.subr.mxu0 0.0
    %951 = vmatpush1.msra.mxu0 0.0
    %952 = vmatprep.subr.mxu0 0.0
    %953 = vmatpush1.msra.mxu0 0.0
    %954 = vmatprep.subr.mxu0 0.0
    %955 = vmatpush1.msra.mxu0 0.0
    %956 = vmatprep.subr.mxu0 0.0
    %957 = vmatpush1.msra.mxu0 0.0
    %958 = vmatprep.subr.mxu0 0.0
    %959 = vmatpush1.msra.mxu0 0.0
    %960 = vmatprep.subr.mxu0 0.0
    %961 = vmatpush1.msra.mxu0 0.0
    %962 = vmatprep.subr.mxu0 0.0
    %963 = vmatpush1.msra.mxu0 0.0
    %964 = vmatprep.subr.mxu0 0.0
    %965 = vmatpush1.msra.mxu0 0.0
    %966 = vmatprep.subr.mxu0 0.0
    %967 = vmatpush1.msra.mxu0 0.0
    %968 = vmatprep.subr.mxu0 0.0
    %969 = vmatpush1.msra.mxu0 0.0
    %970 = vmatprep.subr.mxu0 0.0
    %971 = vmatpush1.msra.mxu0 0.0
    %972 = vmatprep.subr.mxu0 0.0
    %973 = vmatpush1.msra.mxu0 0.0
    %974 = vmatprep.subr.mxu0 0.0
    %975 = vmatpush1.msra.mxu0 0.0
    %976 = vmatprep.subr.mxu0 0.0
    %977 = vmatpush1.msra.mxu0 0.0
    %978 = vmatprep.subr.mxu0 0.0
    %979 = vmatpush1.msra.mxu0 0.0
    %980 = vmatprep.subr.mxu0 0.0
    %981 = vmatpush1.msra.mxu0 0.0
    %982 = vmatprep.subr.mxu0 0.0
    %983 = vmatpush1.msra.mxu0 0.0
    %984 = vmatprep.subr.mxu0 0.0
    %985 = vmatpush1.msra.mxu0 0.0
    %986 = vmatprep.mubr.f32.mxu0 0.0
    %987 = vmatmul.mubr.f32.gmra.mrb[0].mxu0 %v899
    %v988 = vpop.f32.mrb[0].mxu0
    %v989 = vadd.f32 0.0, %v988
    %v990 = vpop.f32.mrb[0].mxu0
    %991 = vmatprep.mubr.f32.mxu0 0.0
    %992 = vmatmul.mubr.f32.gmra.mrb[0].mxu0 %v902
    %v993 = vpop.f32.mrb[0].mxu0
    %v994 = vadd.f32 0.0, %v993
    %v995 = vpop.f32.mrb[0].mxu0
    %996 = vmatprep.mubr.f32.mxu0 0.0
    %997 = vmatmul.mubr.f32.gmra.mrb[0].mxu0 %v905
    %v998 = vpop.f32.mrb[0].mxu0
    %v999 = vadd.f32 0.0, %v998
    %v1000 = vpop.f32.mrb[0].mxu0
    %1001 = vmatprep.mubr.f32.mxu0 0.0
    %1002 = vmatmul.mubr.f32.gmra.mrb[0].mxu0 %v908
    %v1003 = vpop.f32.mrb[0].mxu0
    %v1004 = vadd.f32 0.0, %v1003
    %v1005 = vpop.f32.mrb[0].mxu0
    %1006 = vmatprep.mubr.f32.mxu0 0.0
    %1007 = vmatmul.mubr.f32.gmra.mrb[0].mxu0 %v911
    %v1008 = vpop.f32.mrb[0].mxu0
    %v1009 = vadd.f32 0.0, %v1008
    %v1010 = vpop.f32.mrb[0].mxu0
    %1011 = vmatprep.mubr.f32.mxu0 0.0
    %1012 = vmatmul.mubr.f32.gmra.mrb[0].mxu0 %v914
    %v1013 = vpop.f32.mrb[0].mxu0
    %v1014 = vadd.f32 0.0, %v1013
    %v1015 = vpop.f32.mrb[0].mxu0
    %1016 = vmatprep.mubr.f32.mxu0 0.0
    %1017 = vmatmul.mubr.f32.gmra.mrb[0].mxu0 %v917
    %v1018 = vpop.f32.mrb[0].mxu0
    %v1019 = vadd.f32 0.0, %v1018
    %v1020 = vpop.f32.mrb[0].mxu0
    %1021 = vmatprep.mubr.f32.mxu0 0.0
    %1022 = vmatmul.mubr.f32.gmra.mrb[0].mxu0 %v920
    %v1023 = vpop.f32.mrb[0].mxu0
    %v1024 = vadd.f32 0.0, %v1023
    %v1025 = vpop.f32.mrb[0].mxu0
    %1026 = vdwg.mxu0
    %v1027 = vld [vmem:[#allocation6 + $0x1] sm:$0x1]
    %v1028 = vlaneseq
    %v1029 = vshrl.u32 %v1028, 7
    %v1030 = vsub.s32 0, %v1029
    %v1031 = vrot.slane %v1027, %v1030
    %v1032 = vmul.f32 %v989, %v1031
    %v1033 = vmul.f32 %v994, %v1031
    %v1034 = vmul.f32 %v999, %v1031
    %v1035 = vmul.f32 %v1004, %v1031
    %v1036 = vmul.f32 %v1009, %v1031
    %v1037 = vmul.f32 %v1014, %v1031
    %v1038 = vmul.f32 %v1019, %v1031
    %v1039 = vmul.f32 %v1024, %v1031
    %v1040 = vld [vmem:[#allocation6] sm:$0x1]
    %v1041 = vlaneseq
    %v1042 = vshrl.u32 %v1041, 7
    %v1043 = vsub.s32 0, %v1042
    %v1044 = vrot.slane %v1040, %v1043
    %v1045 = vmul.f32 %v989, %v1044
    %v1046 = vmul.f32 %v994, %v1044
    %v1047 = vmul.f32 %v999, %v1044
    %v1048 = vmul.f32 %v1004, %v1044
    %v1049 = vmul.f32 %v1009, %v1044
    %v1050 = vmul.f32 %v1014, %v1044
    %v1051 = vmul.f32 %v1019, %v1044
    %v1052 = vmul.f32 %v1024, %v1044
    %v1054 = vsel %vm363, %v1045, 0
    %v1057 = vsel %vm363, %v1046, 0
    %v1060 = vsel %vm363, %v1047, 0
    %v1063 = vsel %vm363, %v1048, 0
    %v1066 = vsel %vm363, %v1049, 0
    %v1069 = vsel %vm363, %v1050, 0
    %v1072 = vsel %vm363, %v1051, 0
    %v1075 = vsel %vm363, %v1052, 0
    %1077 = vmatprep.subr.mxu0 0.0
    %1078 = vmatpush1.xpose.msra.mxu0 %v1054
    %1079 = vmatprep.subr.mxu0 0.0
    %1080 = vmatpush1.xpose.msra.mxu0 %v1057
    %1081 = vmatprep.subr.mxu0 0.0
    %1082 = vmatpush1.xpose.msra.mxu0 %v1060
    %1083 = vmatprep.subr.mxu0 0.0
    %1084 = vmatpush1.xpose.msra.mxu0 %v1063
    %1085 = vmatprep.subr.mxu0 0.0
    %1086 = vmatpush1.xpose.msra.mxu0 %v1066
    %1087 = vmatprep.subr.mxu0 0.0
    %1088 = vmatpush1.xpose.msra.mxu0 %v1069
    %1089 = vmatprep.subr.mxu0 0.0
    %1090 = vmatpush1.xpose.msra.mxu0 %v1072
    %1091 = vmatprep.subr.mxu0 0.0
    %1092 = vmatpush1.xpose.msra.mxu0 %v1075
    %1093 = vmatprep.subr.mxu0 0.0
    %1094 = vmatpush1.xpose.msra.mxu0 0.0
    %1095 = vmatprep.subr.mxu0 0.0
    %1096 = vmatpush1.xpose.msra.mxu0 0.0
    %1097 = vmatprep.subr.mxu0 0.0
    %1098 = vmatpush1.xpose.msra.mxu0 0.0
    %1099 = vmatprep.subr.mxu0 0.0
    %1100 = vmatpush1.xpose.msra.mxu0 0.0
    %1101 = vmatprep.subr.mxu0 0.0
    %1102 = vmatpush1.xpose.msra.mxu0 0.0
    %1103 = vmatprep.subr.mxu0 0.0
    %1104 = vmatpush1.xpose.msra.mxu0 0.0
    %1105 = vmatprep.subr.mxu0 0.0
    %1106 = vmatpush1.xpose.msra.mxu0 0.0
    %1107 = vmatprep.subr.mxu0 0.0
    %1108 = vmatpush1.xpose.msra.mxu0 0.0
    %1109 = vmatprep.subr.mxu0 0.0
    %1110 = vmatpush1.xpose.msra.mxu0 0.0
    %1111 = vmatprep.subr.mxu0 0.0
    %1112 = vmatpush1.xpose.msra.mxu0 0.0
    %1113 = vmatprep.subr.mxu0 0.0
    %1114 = vmatpush1.xpose.msra.mxu0 0.0
    %1115 = vmatprep.subr.mxu0 0.0
    %1116 = vmatpush1.xpose.msra.mxu0 0.0
    %1117 = vmatprep.subr.mxu0 0.0
    %1118 = vmatpush1.xpose.msra.mxu0 0.0
    %1119 = vmatprep.subr.mxu0 0.0
    %1120 = vmatpush1.xpose.msra.mxu0 0.0
    %1121 = vmatprep.subr.mxu0 0.0
    %1122 = vmatpush1.xpose.msra.mxu0 0.0
    %1123 = vmatprep.subr.mxu0 0.0
    %1124 = vmatpush1.xpose.msra.mxu0 0.0
    %1125 = vmatprep.subr.mxu0 0.0
    %1126 = vmatpush1.xpose.msra.mxu0 0.0
    %1127 = vmatprep.subr.mxu0 0.0
    %1128 = vmatpush1.xpose.msra.mxu0 0.0
    %1129 = vmatprep.subr.mxu0 0.0
    %1130 = vmatpush1.xpose.msra.mxu0 0.0
    %1131 = vmatprep.subr.mxu0 0.0
    %1132 = vmatpush1.xpose.msra.mxu0 0.0
    %1133 = vmatprep.subr.mxu0 0.0
    %1134 = vmatpush1.xpose.msra.mxu0 0.0
    %1135 = vmatprep.subr.mxu0 0.0
    %1136 = vmatpush1.xpose.msra.mxu0 0.0
    %1137 = vmatprep.subr.mxu0 0.0
    %1138 = vmatpush1.xpose.msra.mxu0 0.0
    %1139 = vmatprep.subr.mxu0 0.0
    %1140 = vmatpush1.xpose.msra.mxu0 0.0
    %1141 = vmatprep.mubr.f32.mxu0 0.0
    %1142 = vmatmul.mubr.f32.gmra.mrb[0].mxu0 %v365
    %v1143 = vpop.f32.mrb[0].mxu0
    %v1144 = vadd.f32 0.0, %v1143
    %v1145 = vpop.f32.mrb[0].mxu0
    %1146 = vmatprep.mubr.f32.mxu0 0.0
    %1147 = vmatmul.mubr.f32.gmra.mrb[0].mxu0 %v365
    %v1148 = vpop.f32.mrb[0].mxu0
    %v1149 = vadd.f32 0.0, %v1148
    %v1150 = vpop.f32.mrb[0].mxu0
    %1151 = vmatprep.mubr.f32.mxu0 0.0
    %1152 = vmatmul.mubr.f32.gmra.mrb[0].mxu0 %v365
    %v1153 = vpop.f32.mrb[0].mxu0
    %v1154 = vadd.f32 0.0, %v1153
    %v1155 = vpop.f32.mrb[0].mxu0
    %1156 = vmatprep.mubr.f32.mxu0 0.0
    %1157 = vmatmul.mubr.f32.gmra.mrb[0].mxu0 %v365
    %v1158 = vpop.f32.mrb[0].mxu0
    %v1159 = vadd.f32 0.0, %v1158
    %v1160 = vpop.f32.mrb[0].mxu0
    %1161 = vmatprep.mubr.f32.mxu0 0.0
    %1162 = vmatmul.mubr.f32.gmra.mrb[0].mxu0 %v365
    %v1163 = vpop.f32.mrb[0].mxu0
    %v1164 = vadd.f32 0.0, %v1163
    %v1165 = vpop.f32.mrb[0].mxu0
    %1166 = vmatprep.mubr.f32.mxu0 0.0
    %1167 = vmatmul.mubr.f32.gmra.mrb[0].mxu0 %v365
    %v1168 = vpop.f32.mrb[0].mxu0
    %v1169 = vadd.f32 0.0, %v1168
    %v1170 = vpop.f32.mrb[0].mxu0
    %1171 = vmatprep.mubr.f32.mxu0 0.0
    %1172 = vmatmul.mubr.f32.gmra.mrb[0].mxu0 %v365
    %v1173 = vpop.f32.mrb[0].mxu0
    %v1174 = vadd.f32 0.0, %v1173
    %v1175 = vpop.f32.mrb[0].mxu0
    %1176 = vmatprep.mubr.f32.mxu0 0.0
    %1177 = vmatmul.mubr.f32.gmra.mrb[0].mxu0 %v365
    %v1178 = vpop.f32.mrb[0].mxu0
    %v1179 = vadd.f32 0.0, %v1178
    %v1180 = vpop.f32.mrb[0].mxu0
    %1181 = vdwg.mxu0
    %v1183 = vsel %vm363, %v1032, 0
    %v1186 = vsel %vm363, %v1033, 0
    %v1189 = vsel %vm363, %v1034, 0
    %v1192 = vsel %vm363, %v1035, 0
    %v1195 = vsel %vm363, %v1036, 0
    %v1198 = vsel %vm363, %v1037, 0
    %v1201 = vsel %vm363, %v1038, 0
    %v1204 = vsel %vm363, %v1039, 0
    %1206 = vmatprep.subr.mxu0 0.0
    %1207 = vmatpush1.xpose.msra.mxu0 %v365
    %1208 = vmatprep.subr.mxu0 0.0
    %1209 = vmatpush1.xpose.msra.mxu0 %v365
    %1210 = vmatprep.subr.mxu0 0.0
    %1211 = vmatpush1.xpose.msra.mxu0 %v365
    %1212 = vmatprep.subr.mxu0 0.0
    %1213 = vmatpush1.xpose.msra.mxu0 %v365
    %1214 = vmatprep.subr.mxu0 0.0
    %1215 = vmatpush1.xpose.msra.mxu0 %v365
    %1216 = vmatprep.subr.mxu0 0.0
    %1217 = vmatpush1.xpose.msra.mxu0 %v365
    %1218 = vmatprep.subr.mxu0 0.0
    %1219 = vmatpush1.xpose.msra.mxu0 %v365
    %1220 = vmatprep.subr.mxu0 0.0
    %1221 = vmatpush1.xpose.msra.mxu0 %v365
    %1222 = vmatprep.subr.mxu0 0.0
    %1223 = vmatpush1.xpose.msra.mxu0 0.0
    %1224 = vmatprep.subr.mxu0 0.0
    %1225 = vmatpush1.xpose.msra.mxu0 0.0
    %1226 = vmatprep.subr.mxu0 0.0
    %1227 = vmatpush1.xpose.msra.mxu0 0.0
    %1228 = vmatprep.subr.mxu0 0.0
    %1229 = vmatpush1.xpose.msra.mxu0 0.0
    %1230 = vmatprep.subr.mxu0 0.0
    %1231 = vmatpush1.xpose.msra.mxu0 0.0
    %1232 = vmatprep.subr.mxu0 0.0
    %1233 = vmatpush1.xpose.msra.mxu0 0.0
    %1234 = vmatprep.subr.mxu0 0.0
    %1235 = vmatpush1.xpose.msra.mxu0 0.0
    %1236 = vmatprep.subr.mxu0 0.0
    %1237 = vmatpush1.xpose.msra.mxu0 0.0
    %1238 = vmatprep.subr.mxu0 0.0
    %1239 = vmatpush1.xpose.msra.mxu0 0.0
    %1240 = vmatprep.subr.mxu0 0.0
    %1241 = vmatpush1.xpose.msra.mxu0 0.0
    %1242 = vmatprep.subr.mxu0 0.0
    %1243 = vmatpush1.xpose.msra.mxu0 0.0
    %1244 = vmatprep.subr.mxu0 0.0
    %1245 = vmatpush1.xpose.msra.mxu0 0.0
    %1246 = vmatprep.subr.mxu0 0.0
    %1247 = vmatpush1.xpose.msra.mxu0 0.0
    %1248 = vmatprep.subr.mxu0 0.0
    %1249 = vmatpush1.xpose.msra.mxu0 0.0
    %1250 = vmatprep.subr.mxu0 0.0
    %1251 = vmatpush1.xpose.msra.mxu0 0.0
    %1252 = vmatprep.subr.mxu0 0.0
    %1253 = vmatpush1.xpose.msra.mxu0 0.0
    %1254 = vmatprep.subr.mxu0 0.0
    %1255 = vmatpush1.xpose.msra.mxu0 0.0
    %1256 = vmatprep.subr.mxu0 0.0
    %1257 = vmatpush1.xpose.msra.mxu0 0.0
    %1258 = vmatprep.subr.mxu0 0.0
    %1259 = vmatpush1.xpose.msra.mxu0 0.0
    %1260 = vmatprep.subr.mxu0 0.0
    %1261 = vmatpush1.xpose.msra.mxu0 0.0
    %1262 = vmatprep.subr.mxu0 0.0
    %1263 = vmatpush1.xpose.msra.mxu0 0.0
    %1264 = vmatprep.subr.mxu0 0.0
    %1265 = vmatpush1.xpose.msra.mxu0 0.0
    %1266 = vmatprep.subr.mxu0 0.0
    %1267 = vmatpush1.xpose.msra.mxu0 0.0
    %1268 = vmatprep.subr.mxu0 0.0
    %1269 = vmatpush1.xpose.msra.mxu0 0.0
    %1270 = vmatprep.mubr.f32.mxu0 0.0
    %1271 = vmatmul.mubr.f32.gmra.mrb[0].mxu0 %v1183
    %v1272 = vpop.f32.mrb[0].mxu0
    %v1273 = vadd.f32 %v1144, %v1272
    %v1274 = vpop.f32.mrb[0].mxu0
    %1275 = vmatprep.mubr.f32.mxu0 0.0
    %1276 = vmatmul.mubr.f32.gmra.mrb[0].mxu0 %v1186
    %v1277 = vpop.f32.mrb[0].mxu0
    %v1278 = vadd.f32 %v1149, %v1277
    %v1279 = vpop.f32.mrb[0].mxu0
    %1280 = vmatprep.mubr.f32.mxu0 0.0
    %1281 = vmatmul.mubr.f32.gmra.mrb[0].mxu0 %v1189
    %v1282 = vpop.f32.mrb[0].mxu0
    %v1283 = vadd.f32 %v1154, %v1282
    %v1284 = vpop.f32.mrb[0].mxu0
    %1285 = vmatprep.mubr.f32.mxu0 0.0
    %1286 = vmatmul.mubr.f32.gmra.mrb[0].mxu0 %v1192
    %v1287 = vpop.f32.mrb[0].mxu0
    %v1288 = vadd.f32 %v1159, %v1287
    %v1289 = vpop.f32.mrb[0].mxu0
    %1290 = vmatprep.mubr.f32.mxu0 0.0
    %1291 = vmatmul.mubr.f32.gmra.mrb[0].mxu0 %v1195
    %v1292 = vpop.f32.mrb[0].mxu0
    %v1293 = vadd.f32 %v1164, %v1292
    %v1294 = vpop.f32.mrb[0].mxu0
    %1295 = vmatprep.mubr.f32.mxu0 0.0
    %1296 = vmatmul.mubr.f32.gmra.mrb[0].mxu0 %v1198
    %v1297 = vpop.f32.mrb[0].mxu0
    %v1298 = vadd.f32 %v1169, %v1297
    %v1299 = vpop.f32.mrb[0].mxu0
    %1300 = vmatprep.mubr.f32.mxu0 0.0
    %1301 = vmatmul.mubr.f32.gmra.mrb[0].mxu0 %v1201
    %v1302 = vpop.f32.mrb[0].mxu0
    %v1303 = vadd.f32 %v1174, %v1302
    %v1304 = vpop.f32.mrb[0].mxu0
    %1305 = vmatprep.mubr.f32.mxu0 0.0
    %1306 = vmatmul.mubr.f32.gmra.mrb[0].mxu0 %v1204
    %v1307 = vpop.f32.mrb[0].mxu0
    %v1308 = vadd.f32 %v1179, %v1307
    %v1309 = vpop.f32.mrb[0].mxu0
    %1310 = vdwg.mxu0
    %vm1311 = vcmp.ge.f32.partialorder %v1273, 0.0
    %vm1312 = vcmp.ge.f32.partialorder %v1278, 0.0
    %vm1313 = vcmp.ge.f32.partialorder %v1283, 0.0
    %vm1314 = vcmp.ge.f32.partialorder %v1288, 0.0
    %vm1315 = vcmp.ge.f32.partialorder %v1293, 0.0
    %vm1316 = vcmp.ge.f32.partialorder %v1298, 0.0
    %vm1317 = vcmp.ge.f32.partialorder %v1303, 0.0
    %vm1318 = vcmp.ge.f32.partialorder %v1308, 0.0
    %v1319 = vmul.f32 %v1273, 0.2
    %v1320 = vmul.f32 %v1278, 0.2
    %v1321 = vmul.f32 %v1283, 0.2
    %v1322 = vmul.f32 %v1288, 0.2
    %v1323 = vmul.f32 %v1293, 0.2
    %v1324 = vmul.f32 %v1298, 0.2
    %v1325 = vmul.f32 %v1303, 0.2
    %v1326 = vmul.f32 %v1308, 0.2
    %v1327 = vsel %vm1311, %v1273, %v1319
    %v1328 = vsel %vm1312, %v1278, %v1320
    %v1329 = vsel %vm1313, %v1283, %v1321
    %v1330 = vsel %vm1314, %v1288, %v1322
    %v1331 = vsel %vm1315, %v1293, %v1323
    %v1332 = vsel %vm1316, %v1298, %v1324
    %v1333 = vsel %vm1317, %v1303, %v1325
    %v1334 = vsel %vm1318, %v1308, %v1326
    %v1335 = vsel %vm649, %v1327, -1e+30
    %v1336 = vsel %vm650, %v1328, -1e+30
    %v1337 = vsel %vm651, %v1329, -1e+30
    %v1338 = vsel %vm652, %v1330, -1e+30
    %v1339 = vsel %vm653, %v1331, -1e+30
    %v1340 = vsel %vm654, %v1332, -1e+30
    %v1341 = vsel %vm655, %v1333, -1e+30
    %v1342 = vsel %vm656, %v1334, -1e+30
    %v1343 = vsel %vm665, %v1335, -inf
    %1344 = vmax.xlane.f32.xlu0 %v1343
    %v1345 = vpop.xlane.xlu0 %1344
    %v1346 = vsel %vm665, %v1336, -inf
    %1347 = vmax.xlane.f32.xlu0 %v1346
    %v1348 = vpop.xlane.xlu0 %1347
    %v1349 = vsel %vm665, %v1337, -inf
    %1350 = vmax.xlane.f32.xlu0 %v1349
    %v1351 = vpop.xlane.xlu0 %1350
    %v1352 = vsel %vm665, %v1338, -inf
    %1353 = vmax.xlane.f32.xlu0 %v1352
    %v1354 = vpop.xlane.xlu0 %1353
    %v1355 = vsel %vm665, %v1339, -inf
    %1356 = vmax.xlane.f32.xlu0 %v1355
    %v1357 = vpop.xlane.xlu0 %1356
    %v1358 = vsel %vm665, %v1340, -inf
    %1359 = vmax.xlane.f32.xlu0 %v1358
    %v1360 = vpop.xlane.xlu0 %1359
    %v1361 = vsel %vm665, %v1341, -inf
    %1362 = vmax.xlane.f32.xlu0 %v1361
    %v1363 = vpop.xlane.xlu0 %1362
    %v1364 = vsel %vm665, %v1342, -inf
    %1365 = vmax.xlane.f32.xlu0 %v1364
    %v1366 = vpop.xlane.xlu0 %1365
    %v1367 = vsub.f32 %v1335, %v1345
    %v1368 = vsub.f32 %v1336, %v1348
    %v1369 = vsub.f32 %v1337, %v1351
    %v1370 = vsub.f32 %v1338, %v1354
    %v1371 = vsub.f32 %v1339, %v1357
    %v1372 = vsub.f32 %v1340, %v1360
    %v1373 = vsub.f32 %v1341, %v1363
    %v1374 = vsub.f32 %v1342, %v1366
    %v1375 = vmul.f32 %v1367, 1.442695
    %v1376 = vpow.pop %v1375
    %v1377 = vmul.f32 %v1368, 1.442695
    %v1378 = vpow.pop %v1377
    %v1379 = vmul.f32 %v1369, 1.442695
    %v1380 = vpow.pop %v1379
    %v1381 = vmul.f32 %v1370, 1.442695
    %v1382 = vpow.pop %v1381
    %v1383 = vmul.f32 %v1371, 1.442695
    %v1384 = vpow.pop %v1383
    %v1385 = vmul.f32 %v1372, 1.442695
    %v1386 = vpow.pop %v1385
    %v1387 = vmul.f32 %v1373, 1.442695
    %v1388 = vpow.pop %v1387
    %v1389 = vmul.f32 %v1374, 1.442695
    %v1390 = vpow.pop %v1389
    %v1391 = vsel %vm665, %v1376, 0.0
    %1392 = vadd.xlane.f32.xlu0 %v1391
    %v1393 = vpop.xlane.xlu0 %1392
    %v1394 = vsel %vm665, %v1378, 0.0
    %1395 = vadd.xlane.f32.xlu0 %v1394
    %v1396 = vpop.xlane.xlu0 %1395
    %v1397 = vsel %vm665, %v1380, 0.0
    %1398 = vadd.xlane.f32.xlu0 %v1397
    %v1399 = vpop.xlane.xlu0 %1398
    %v1400 = vsel %vm665, %v1382, 0.0
    %1401 = vadd.xlane.f32.xlu0 %v1400
    %v1402 = vpop.xlane.xlu0 %1401
    %v1403 = vsel %vm665, %v1384, 0.0
    %1404 = vadd.xlane.f32.xlu0 %v1403
    %v1405 = vpop.xlane.xlu0 %1404
    %v1406 = vsel %vm665, %v1386, 0.0
    %1407 = vadd.xlane.f32.xlu0 %v1406
    %v1408 = vpop.xlane.xlu0 %1407
    %v1409 = vsel %vm665, %v1388, 0.0
    %1410 = vadd.xlane.f32.xlu0 %v1409
    %v1411 = vpop.xlane.xlu0 %1410
    %v1412 = vsel %vm665, %v1390, 0.0
    %1413 = vadd.xlane.f32.xlu0 %v1412
    %v1414 = vpop.xlane.xlu0 %1413
    %v1415 = vrcp.pop %v1393
    %v1416 = vrcp.pop %v1396
    %v1417 = vrcp.pop %v1399
    %v1418 = vrcp.pop %v1402
    %v1419 = vrcp.pop %v1405
    %v1420 = vrcp.pop %v1408
    %v1421 = vrcp.pop %v1411
    %v1422 = vrcp.pop %v1414
    %v1423 = vmul.f32 %v1376, %v1415
    %v1424 = vmul.f32 %v1378, %v1416
    %v1425 = vmul.f32 %v1380, %v1417
    %v1426 = vmul.f32 %v1382, %v1418
    %v1427 = vmul.f32 %v1384, %v1419
    %v1428 = vmul.f32 %v1386, %v1420
    %v1429 = vmul.f32 %v1388, %v1421
    %v1430 = vmul.f32 %v1390, %v1422
    %v1431 = vld [vmem:[#allocation6 + $0x2] sm:$0x1]
    %v1432 = vlaneseq
    %v1433 = vshrl.u32 %v1432, 7
    %v1434 = vsub.s32 0, %v1433
    %v1435 = vrot.slane %v1431, %v1434
    %v1437 = vsel %vm665, %v1423, 0
    %v1440 = vsel %vm665, %v1424, 0
    %v1443 = vsel %vm665, %v1425, 0
    %v1446 = vsel %vm665, %v1426, 0
    %v1449 = vsel %vm665, %v1427, 0
    %v1452 = vsel %vm665, %v1428, 0
    %v1455 = vsel %vm665, %v1429, 0
    %v1458 = vsel %vm665, %v1430, 0
    %1460 = vmatprep.subr.mxu0 0.0
    %1461 = vmatpush1.msra.mxu0 %v989
    %1462 = vmatprep.subr.mxu0 0.0
    %1463 = vmatpush1.msra.mxu0 %v994
    %1464 = vmatprep.subr.mxu0 0.0
    %1465 = vmatpush1.msra.mxu0 %v999
    %1466 = vmatprep.subr.mxu0 0.0
    %1467 = vmatpush1.msra.mxu0 %v1004
    %1468 = vmatprep.subr.mxu0 0.0
    %1469 = vmatpush1.msra.mxu0 %v1009
    %1470 = vmatprep.subr.mxu0 0.0
    %1471 = vmatpush1.msra.mxu0 %v1014
    %1472 = vmatprep.subr.mxu0 0.0
    %1473 = vmatpush1.msra.mxu0 %v1019
    %1474 = vmatprep.subr.mxu0 0.0
    %1475 = vmatpush1.msra.mxu0 %v1024
    %1476 = vmatprep.subr.mxu0 0.0
    %1477 = vmatpush1.msra.mxu0 0.0
    %1478 = vmatprep.subr.mxu0 0.0
    %1479 = vmatpush1.msra.mxu0 0.0
    %1480 = vmatprep.subr.mxu0 0.0
    %1481 = vmatpush1.msra.mxu0 0.0
    %1482 = vmatprep.subr.mxu0 0.0
    %1483 = vmatpush1.msra.mxu0 0.0
    %1484 = vmatprep.subr.mxu0 0.0
    %1485 = vmatpush1.msra.mxu0 0.0
    %1486 = vmatprep.subr.mxu0 0.0
    %1487 = vmatpush1.msra.mxu0 0.0
    %1488 = vmatprep.subr.mxu0 0.0
    %1489 = vmatpush1.msra.mxu0 0.0
    %1490 = vmatprep.subr.mxu0 0.0
    %1491 = vmatpush1.msra.mxu0 0.0
    %1492 = vmatprep.subr.mxu0 0.0
    %1493 = vmatpush1.msra.mxu0 0.0
    %1494 = vmatprep.subr.mxu0 0.0
    %1495 = vmatpush1.msra.mxu0 0.0
    %1496 = vmatprep.subr.mxu0 0.0
    %1497 = vmatpush1.msra.mxu0 0.0
    %1498 = vmatprep.subr.mxu0 0.0
    %1499 = vmatpush1.msra.mxu0 0.0
    %1500 = vmatprep.subr.mxu0 0.0
    %1501 = vmatpush1.msra.mxu0 0.0
    %1502 = vmatprep.subr.mxu0 0.0
    %1503 = vmatpush1.msra.mxu0 0.0
    %1504 = vmatprep.subr.mxu0 0.0
    %1505 = vmatpush1.msra.mxu0 0.0
    %1506 = vmatprep.subr.mxu0 0.0
    %1507 = vmatpush1.msra.mxu0 0.0
    %1508 = vmatprep.subr.mxu0 0.0
    %1509 = vmatpush1.msra.mxu0 0.0
    %1510 = vmatprep.subr.mxu0 0.0
    %1511 = vmatpush1.msra.mxu0 0.0
    %1512 = vmatprep.subr.mxu0 0.0
    %1513 = vmatpush1.msra.mxu0 0.0
    %1514 = vmatprep.subr.mxu0 0.0
    %1515 = vmatpush1.msra.mxu0 0.0
    %1516 = vmatprep.subr.mxu0 0.0
    %1517 = vmatpush1.msra.mxu0 0.0
    %1518 = vmatprep.subr.mxu0 0.0
    %1519 = vmatpush1.msra.mxu0 0.0
    %1520 = vmatprep.subr.mxu0 0.0
    %1521 = vmatpush1.msra.mxu0 0.0
    %1522 = vmatprep.subr.mxu0 0.0
    %1523 = vmatpush1.msra.mxu0 0.0
    %1524 = vmatprep.mubr.f32.mxu0 0.0
    %1525 = vmatmul.mubr.f32.gmra.mrb[0].mxu0 %v1437
    %v1526 = vpop.f32.mrb[0].mxu0
    %v1527 = vadd.f32 %v1435, %v1526
    %v1528 = vpop.f32.mrb[0].mxu0
    %1529 = vmatprep.mubr.f32.mxu0 0.0
    %1530 = vmatmul.mubr.f32.gmra.mrb[0].mxu0 %v1440
    %v1531 = vpop.f32.mrb[0].mxu0
    %v1532 = vadd.f32 %v1435, %v1531
    %v1533 = vpop.f32.mrb[0].mxu0
    %1534 = vmatprep.mubr.f32.mxu0 0.0
    %1535 = vmatmul.mubr.f32.gmra.mrb[0].mxu0 %v1443
    %v1536 = vpop.f32.mrb[0].mxu0
    %v1537 = vadd.f32 %v1435, %v1536
    %v1538 = vpop.f32.mrb[0].mxu0
    %1539 = vmatprep.mubr.f32.mxu0 0.0
    %1540 = vmatmul.mubr.f32.gmra.mrb[0].mxu0 %v1446
    %v1541 = vpop.f32.mrb[0].mxu0
    %v1542 = vadd.f32 %v1435, %v1541
    %v1543 = vpop.f32.mrb[0].mxu0
    %1544 = vmatprep.mubr.f32.mxu0 0.0
    %1545 = vmatmul.mubr.f32.gmra.mrb[0].mxu0 %v1449
    %v1546 = vpop.f32.mrb[0].mxu0
    %v1547 = vadd.f32 %v1435, %v1546
    %v1548 = vpop.f32.mrb[0].mxu0
    %1549 = vmatprep.mubr.f32.mxu0 0.0
    %1550 = vmatmul.mubr.f32.gmra.mrb[0].mxu0 %v1452
    %v1551 = vpop.f32.mrb[0].mxu0
    %v1552 = vadd.f32 %v1435, %v1551
    %v1553 = vpop.f32.mrb[0].mxu0
    %1554 = vmatprep.mubr.f32.mxu0 0.0
    %1555 = vmatmul.mubr.f32.gmra.mrb[0].mxu0 %v1455
    %v1556 = vpop.f32.mrb[0].mxu0
    %v1557 = vadd.f32 %v1435, %v1556
    %v1558 = vpop.f32.mrb[0].mxu0
    %1559 = vmatprep.mubr.f32.mxu0 0.0
    %1560 = vmatmul.mubr.f32.gmra.mrb[0].mxu0 %v1458
    %v1561 = vpop.f32.mrb[0].mxu0
    %v1562 = vadd.f32 %v1435, %v1561
    %v1563 = vpop.f32.mrb[0].mxu0
    %1564 = vdwg.mxu0
    %v1565 = vmax.f32 %v1527, 0.0
    %v1566 = vmax.f32 %v1532, 0.0
    %v1567 = vmax.f32 %v1537, 0.0
    %v1568 = vmax.f32 %v1542, 0.0
    %v1569 = vmax.f32 %v1547, 0.0
    %v1570 = vmax.f32 %v1552, 0.0
    %v1571 = vmax.f32 %v1557, 0.0
    %v1572 = vmax.f32 %v1562, 0.0
    %v1573 = vld [vmem:[%s9] sm:$0xff]
    %v1574 = vld [vmem:[%s9 + $0x8] sm:$0xff]
    %v1576 = vsel %vm363, %v1565, 0
    %v1579 = vsel %vm363, %v1566, 0
    %v1582 = vsel %vm363, %v1567, 0
    %v1585 = vsel %vm363, %v1568, 0
    %v1588 = vsel %vm363, %v1569, 0
    %v1591 = vsel %vm363, %v1570, 0
    %v1594 = vsel %vm363, %v1571, 0
    %v1597 = vsel %vm363, %v1572, 0
    %1599 = vmatprep.subr.mxu0 0.0
    %1600 = vmatpush1.msra.mxu0 %v1573
    %1601 = vmatprep.subr.mxu0 0.0
    %1602 = vmatpush1.msra.mxu0 %v1574
    %1603 = vmatprep.subr.mxu0 0.0
    %1604 = vmatpush1.msra.mxu0 0.0
    %1605 = vmatprep.subr.mxu0 0.0
    %1606 = vmatpush1.msra.mxu0 0.0
    %1607 = vmatprep.subr.mxu0 0.0
    %1608 = vmatpush1.msra.mxu0 0.0
    %1609 = vmatprep.subr.mxu0 0.0
    %1610 = vmatpush1.msra.mxu0 0.0
    %1611 = vmatprep.subr.mxu0 0.0
    %1612 = vmatpush1.msra.mxu0 0.0
    %1613 = vmatprep.subr.mxu0 0.0
    %1614 = vmatpush1.msra.mxu0 0.0
    %1615 = vmatprep.subr.mxu0 0.0
    %1616 = vmatpush1.msra.mxu0 0.0
    %1617 = vmatprep.subr.mxu0 0.0
    %1618 = vmatpush1.msra.mxu0 0.0
    %1619 = vmatprep.subr.mxu0 0.0
    %1620 = vmatpush1.msra.mxu0 0.0
    %1621 = vmatprep.subr.mxu0 0.0
    %1622 = vmatpush1.msra.mxu0 0.0
    %1623 = vmatprep.subr.mxu0 0.0
    %1624 = vmatpush1.msra.mxu0 0.0
    %1625 = vmatprep.subr.mxu0 0.0
    %1626 = vmatpush1.msra.mxu0 0.0
    %1627 = vmatprep.subr.mxu0 0.0
    %1628 = vmatpush1.msra.mxu0 0.0
    %1629 = vmatprep.subr.mxu0 0.0
    %1630 = vmatpush1.msra.mxu0 0.0
    %1631 = vmatprep.subr.mxu0 0.0
    %1632 = vmatpush1.msra.mxu0 0.0
    %1633 = vmatprep.subr.mxu0 0.0
    %1634 = vmatpush1.msra.mxu0 0.0
    %1635 = vmatprep.subr.mxu0 0.0
    %1636 = vmatpush1.msra.mxu0 0.0
    %1637 = vmatprep.subr.mxu0 0.0
    %1638 = vmatpush1.msra.mxu0 0.0
    %1639 = vmatprep.subr.mxu0 0.0
    %1640 = vmatpush1.msra.mxu0 0.0
    %1641 = vmatprep.subr.mxu0 0.0
    %1642 = vmatpush1.msra.mxu0 0.0
    %1643 = vmatprep.subr.mxu0 0.0
    %1644 = vmatpush1.msra.mxu0 0.0
    %1645 = vmatprep.subr.mxu0 0.0
    %1646 = vmatpush1.msra.mxu0 0.0
    %1647 = vmatprep.subr.mxu0 0.0
    %1648 = vmatpush1.msra.mxu0 0.0
    %1649 = vmatprep.subr.mxu0 0.0
    %1650 = vmatpush1.msra.mxu0 0.0
    %1651 = vmatprep.subr.mxu0 0.0
    %1652 = vmatpush1.msra.mxu0 0.0
    %1653 = vmatprep.subr.mxu0 0.0
    %1654 = vmatpush1.msra.mxu0 0.0
    %1655 = vmatprep.subr.mxu0 0.0
    %1656 = vmatpush1.msra.mxu0 0.0
    %1657 = vmatprep.subr.mxu0 0.0
    %1658 = vmatpush1.msra.mxu0 0.0
    %1659 = vmatprep.subr.mxu0 0.0
    %1660 = vmatpush1.msra.mxu0 0.0
    %1661 = vmatprep.subr.mxu0 0.0
    %1662 = vmatpush1.msra.mxu0 0.0
    %1663 = vmatprep.mubr.f32.mxu0 0.0
    %1664 = vmatmul.mubr.f32.gmra.mrb[0].mxu0 %v1576
    %v1665 = vpop.f32.mrb[0].mxu0
    %v1666 = vadd.f32 0.0, %v1665
    %v1667 = vpop.f32.mrb[0].mxu0
    %1668 = vmatprep.mubr.f32.mxu0 0.0
    %1669 = vmatmul.mubr.f32.gmra.mrb[0].mxu0 %v1579
    %v1670 = vpop.f32.mrb[0].mxu0
    %v1671 = vadd.f32 0.0, %v1670
    %v1672 = vpop.f32.mrb[0].mxu0
    %1673 = vmatprep.mubr.f32.mxu0 0.0
    %1674 = vmatmul.mubr.f32.gmra.mrb[0].mxu0 %v1582
    %v1675 = vpop.f32.mrb[0].mxu0
    %v1676 = vadd.f32 0.0, %v1675
    %v1677 = vpop.f32.mrb[0].mxu0
    %1678 = vmatprep.mubr.f32.mxu0 0.0
    %1679 = vmatmul.mubr.f32.gmra.mrb[0].mxu0 %v1585
    %v1680 = vpop.f32.mrb[0].mxu0
    %v1681 = vadd.f32 0.0, %v1680
    %v1682 = vpop.f32.mrb[0].mxu0
    %1683 = vmatprep.mubr.f32.mxu0 0.0
    %1684 = vmatmul.mubr.f32.gmra.mrb[0].mxu0 %v1588
    %v1685 = vpop.f32.mrb[0].mxu0
    %v1686 = vadd.f32 0.0, %v1685
    %v1687 = vpop.f32.mrb[0].mxu0
    %1688 = vmatprep.mubr.f32.mxu0 0.0
    %1689 = vmatmul.mubr.f32.gmra.mrb[0].mxu0 %v1591
    %v1690 = vpop.f32.mrb[0].mxu0
    %v1691 = vadd.f32 0.0, %v1690
    %v1692 = vpop.f32.mrb[0].mxu0
    %1693 = vmatprep.mubr.f32.mxu0 0.0
    %1694 = vmatmul.mubr.f32.gmra.mrb[0].mxu0 %v1594
    %v1695 = vpop.f32.mrb[0].mxu0
    %v1696 = vadd.f32 0.0, %v1695
    %v1697 = vpop.f32.mrb[0].mxu0
    %1698 = vmatprep.mubr.f32.mxu0 0.0
    %1699 = vmatmul.mubr.f32.gmra.mrb[0].mxu0 %v1597
    %v1700 = vpop.f32.mrb[0].mxu0
    %v1701 = vadd.f32 0.0, %v1700
    %v1702 = vpop.f32.mrb[0].mxu0
    %1703 = vdwg.mxu0
    %v1704 = vld [vmem:[%s10 + $0x1] sm:$0x1]
    %v1705 = vlaneseq
    %v1706 = vshrl.u32 %v1705, 7
    %v1707 = vsub.s32 0, %v1706
    %v1708 = vrot.slane %v1704, %v1707
    %v1709 = vmul.f32 %v1666, %v1708
    %v1710 = vmul.f32 %v1671, %v1708
    %v1711 = vmul.f32 %v1676, %v1708
    %v1712 = vmul.f32 %v1681, %v1708
    %v1713 = vmul.f32 %v1686, %v1708
    %v1714 = vmul.f32 %v1691, %v1708
    %v1715 = vmul.f32 %v1696, %v1708
    %v1716 = vmul.f32 %v1701, %v1708
    %v1717 = vld [vmem:[%s10] sm:$0x1]
    %v1718 = vlaneseq
    %v1719 = vshrl.u32 %v1718, 7
    %v1720 = vsub.s32 0, %v1719
    %v1721 = vrot.slane %v1717, %v1720
    %v1722 = vmul.f32 %v1666, %v1721
    %v1723 = vmul.f32 %v1671, %v1721
    %v1724 = vmul.f32 %v1676, %v1721
    %v1725 = vmul.f32 %v1681, %v1721
    %v1726 = vmul.f32 %v1686, %v1721
    %v1727 = vmul.f32 %v1691, %v1721
    %v1728 = vmul.f32 %v1696, %v1721
    %v1729 = vmul.f32 %v1701, %v1721
    %v1730 = vsel %vm98, 1.0, 0
    %v1733 = vsel %vm98, %v1722, 0
    %v1736 = vsel %vm98, %v1723, 0
    %v1739 = vsel %vm98, %v1724, 0
    %v1742 = vsel %vm98, %v1725, 0
    %v1745 = vsel %vm98, %v1726, 0
    %v1748 = vsel %vm98, %v1727, 0
    %v1751 = vsel %vm98, %v1728, 0
    %v1754 = vsel %vm98, %v1729, 0
    %1756 = vmatprep.subr.mxu0 0.0
    %1757 = vmatpush1.xpose.msra.mxu0 %v1733
    %1758 = vmatprep.subr.mxu0 0.0
    %1759 = vmatpush1.xpose.msra.mxu0 %v1736
    %1760 = vmatprep.subr.mxu0 0.0
    %1761 = vmatpush1.xpose.msra.mxu0 %v1739
    %1762 = vmatprep.subr.mxu0 0.0
    %1763 = vmatpush1.xpose.msra.mxu0 %v1742
    %1764 = vmatprep.subr.mxu0 0.0
    %1765 = vmatpush1.xpose.msra.mxu0 %v1745
    %1766 = vmatprep.subr.mxu0 0.0
    %1767 = vmatpush1.xpose.msra.mxu0 %v1748
    %1768 = vmatprep.subr.mxu0 0.0
    %1769 = vmatpush1.xpose.msra.mxu0 %v1751
    %1770 = vmatprep.subr.mxu0 0.0
    %1771 = vmatpush1.xpose.msra.mxu0 %v1754
    %1772 = vmatprep.subr.mxu0 0.0
    %1773 = vmatpush1.xpose.msra.mxu0 0.0
    %1774 = vmatprep.subr.mxu0 0.0
    %1775 = vmatpush1.xpose.msra.mxu0 0.0
    %1776 = vmatprep.subr.mxu0 0.0
    %1777 = vmatpush1.xpose.msra.mxu0 0.0
    %1778 = vmatprep.subr.mxu0 0.0
    %1779 = vmatpush1.xpose.msra.mxu0 0.0
    %1780 = vmatprep.subr.mxu0 0.0
    %1781 = vmatpush1.xpose.msra.mxu0 0.0
    %1782 = vmatprep.subr.mxu0 0.0
    %1783 = vmatpush1.xpose.msra.mxu0 0.0
    %1784 = vmatprep.subr.mxu0 0.0
    %1785 = vmatpush1.xpose.msra.mxu0 0.0
    %1786 = vmatprep.subr.mxu0 0.0
    %1787 = vmatpush1.xpose.msra.mxu0 0.0
    %1788 = vmatprep.subr.mxu0 0.0
    %1789 = vmatpush1.xpose.msra.mxu0 0.0
    %1790 = vmatprep.subr.mxu0 0.0
    %1791 = vmatpush1.xpose.msra.mxu0 0.0
    %1792 = vmatprep.subr.mxu0 0.0
    %1793 = vmatpush1.xpose.msra.mxu0 0.0
    %1794 = vmatprep.subr.mxu0 0.0
    %1795 = vmatpush1.xpose.msra.mxu0 0.0
    %1796 = vmatprep.subr.mxu0 0.0
    %1797 = vmatpush1.xpose.msra.mxu0 0.0
    %1798 = vmatprep.subr.mxu0 0.0
    %1799 = vmatpush1.xpose.msra.mxu0 0.0
    %1800 = vmatprep.subr.mxu0 0.0
    %1801 = vmatpush1.xpose.msra.mxu0 0.0
    %1802 = vmatprep.subr.mxu0 0.0
    %1803 = vmatpush1.xpose.msra.mxu0 0.0
    %1804 = vmatprep.subr.mxu0 0.0
    %1805 = vmatpush1.xpose.msra.mxu0 0.0
    %1806 = vmatprep.subr.mxu0 0.0
    %1807 = vmatpush1.xpose.msra.mxu0 0.0
    %1808 = vmatprep.subr.mxu0 0.0
    %1809 = vmatpush1.xpose.msra.mxu0 0.0
    %1810 = vmatprep.subr.mxu0 0.0
    %1811 = vmatpush1.xpose.msra.mxu0 0.0
    %1812 = vmatprep.subr.mxu0 0.0
    %1813 = vmatpush1.xpose.msra.mxu0 0.0
    %1814 = vmatprep.subr.mxu0 0.0
    %1815 = vmatpush1.xpose.msra.mxu0 0.0
    %1816 = vmatprep.subr.mxu0 0.0
    %1817 = vmatpush1.xpose.msra.mxu0 0.0
    %1818 = vmatprep.subr.mxu0 0.0
    %1819 = vmatpush1.xpose.msra.mxu0 0.0
    %1820 = vmatprep.mubr.f32.mxu0 0.0
    %1821 = vmatmul.mubr.f32.gmra.mrb[0].mxu0 %v1730
    %v1822 = vpop.f32.mrb[0].mxu0
    %v1823 = vadd.f32 0.0, %v1822
    %v1824 = vpop.f32.mrb[0].mxu0
    %1825 = vmatprep.mubr.f32.mxu0 0.0
    %1826 = vmatmul.mubr.f32.gmra.mrb[0].mxu0 %v1730
    %v1827 = vpop.f32.mrb[0].mxu0
    %v1828 = vadd.f32 0.0, %v1827
    %v1829 = vpop.f32.mrb[0].mxu0
    %1830 = vmatprep.mubr.f32.mxu0 0.0
    %1831 = vmatmul.mubr.f32.gmra.mrb[0].mxu0 %v1730
    %v1832 = vpop.f32.mrb[0].mxu0
    %v1833 = vadd.f32 0.0, %v1832
    %v1834 = vpop.f32.mrb[0].mxu0
    %1835 = vmatprep.mubr.f32.mxu0 0.0
    %1836 = vmatmul.mubr.f32.gmra.mrb[0].mxu0 %v1730
    %v1837 = vpop.f32.mrb[0].mxu0
    %v1838 = vadd.f32 0.0, %v1837
    %v1839 = vpop.f32.mrb[0].mxu0
    %1840 = vmatprep.mubr.f32.mxu0 0.0
    %1841 = vmatmul.mubr.f32.gmra.mrb[0].mxu0 %v1730
    %v1842 = vpop.f32.mrb[0].mxu0
    %v1843 = vadd.f32 0.0, %v1842
    %v1844 = vpop.f32.mrb[0].mxu0
    %1845 = vmatprep.mubr.f32.mxu0 0.0
    %1846 = vmatmul.mubr.f32.gmra.mrb[0].mxu0 %v1730
    %v1847 = vpop.f32.mrb[0].mxu0
    %v1848 = vadd.f32 0.0, %v1847
    %v1849 = vpop.f32.mrb[0].mxu0
    %1850 = vmatprep.mubr.f32.mxu0 0.0
    %1851 = vmatmul.mubr.f32.gmra.mrb[0].mxu0 %v1730
    %v1852 = vpop.f32.mrb[0].mxu0
    %v1853 = vadd.f32 0.0, %v1852
    %v1854 = vpop.f32.mrb[0].mxu0
    %1855 = vmatprep.mubr.f32.mxu0 0.0
    %1856 = vmatmul.mubr.f32.gmra.mrb[0].mxu0 %v1730
    %v1857 = vpop.f32.mrb[0].mxu0
    %v1858 = vadd.f32 0.0, %v1857
    %v1859 = vpop.f32.mrb[0].mxu0
    %1860 = vdwg.mxu0
    %v1862 = vsel %vm98, %v1709, 0
    %v1865 = vsel %vm98, %v1710, 0
    %v1868 = vsel %vm98, %v1711, 0
    %v1871 = vsel %vm98, %v1712, 0
    %v1874 = vsel %vm98, %v1713, 0
    %v1877 = vsel %vm98, %v1714, 0
    %v1880 = vsel %vm98, %v1715, 0
    %v1883 = vsel %vm98, %v1716, 0
    %1885 = vmatprep.subr.mxu0 0.0
    %1886 = vmatpush1.xpose.msra.mxu0 %v1730
    %1887 = vmatprep.subr.mxu0 0.0
    %1888 = vmatpush1.xpose.msra.mxu0 %v1730
    %1889 = vmatprep.subr.mxu0 0.0
    %1890 = vmatpush1.xpose.msra.mxu0 %v1730
    %1891 = vmatprep.subr.mxu0 0.0
    %1892 = vmatpush1.xpose.msra.mxu0 %v1730
    %1893 = vmatprep.subr.mxu0 0.0
    %1894 = vmatpush1.xpose.msra.mxu0 %v1730
    %1895 = vmatprep.subr.mxu0 0.0
    %1896 = vmatpush1.xpose.msra.mxu0 %v1730
    %1897 = vmatprep.subr.mxu0 0.0
    %1898 = vmatpush1.xpose.msra.mxu0 %v1730
    %1899 = vmatprep.subr.mxu0 0.0
    %1900 = vmatpush1.xpose.msra.mxu0 %v1730
    %1901 = vmatprep.subr.mxu0 0.0
    %1902 = vmatpush1.xpose.msra.mxu0 0.0
    %1903 = vmatprep.subr.mxu0 0.0
    %1904 = vmatpush1.xpose.msra.mxu0 0.0
    %1905 = vmatprep.subr.mxu0 0.0
    %1906 = vmatpush1.xpose.msra.mxu0 0.0
    %1907 = vmatprep.subr.mxu0 0.0
    %1908 = vmatpush1.xpose.msra.mxu0 0.0
    %1909 = vmatprep.subr.mxu0 0.0
    %1910 = vmatpush1.xpose.msra.mxu0 0.0
    %1911 = vmatprep.subr.mxu0 0.0
    %1912 = vmatpush1.xpose.msra.mxu0 0.0
    %1913 = vmatprep.subr.mxu0 0.0
    %1914 = vmatpush1.xpose.msra.mxu0 0.0
    %1915 = vmatprep.subr.mxu0 0.0
    %1916 = vmatpush1.xpose.msra.mxu0 0.0
    %1917 = vmatprep.subr.mxu0 0.0
    %1918 = vmatpush1.xpose.msra.mxu0 0.0
    %1919 = vmatprep.subr.mxu0 0.0
    %1920 = vmatpush1.xpose.msra.mxu0 0.0
    %1921 = vmatprep.subr.mxu0 0.0
    %1922 = vmatpush1.xpose.msra.mxu0 0.0
    %1923 = vmatprep.subr.mxu0 0.0
    %1924 = vmatpush1.xpose.msra.mxu0 0.0
    %1925 = vmatprep.subr.mxu0 0.0
    %1926 = vmatpush1.xpose.msra.mxu0 0.0
    %1927 = vmatprep.subr.mxu0 0.0
    %1928 = vmatpush1.xpose.msra.mxu0 0.0
    %1929 = vmatprep.subr.mxu0 0.0
    %1930 = vmatpush1.xpose.msra.mxu0 0.0
    %1931 = vmatprep.subr.mxu0 0.0
    %1932 = vmatpush1.xpose.msra.mxu0 0.0
    %1933 = vmatprep.subr.mxu0 0.0
    %1934 = vmatpush1.xpose.msra.mxu0 0.0
    %1935 = vmatprep.subr.mxu0 0.0
    %1936 = vmatpush1.xpose.msra.mxu0 0.0
    %1937 = vmatprep.subr.mxu0 0.0
    %1938 = vmatpush1.xpose.msra.mxu0 0.0
    %1939 = vmatprep.subr.mxu0 0.0
    %1940 = vmatpush1.xpose.msra.mxu0 0.0
    %1941 = vmatprep.subr.mxu0 0.0
    %1942 = vmatpush1.xpose.msra.mxu0 0.0
    %1943 = vmatprep.subr.mxu0 0.0
    %1944 = vmatpush1.xpose.msra.mxu0 0.0
    %1945 = vmatprep.subr.mxu0 0.0
    %1946 = vmatpush1.xpose.msra.mxu0 0.0
    %1947 = vmatprep.subr.mxu0 0.0
    %1948 = vmatpush1.xpose.msra.mxu0 0.0
    %1949 = vmatprep.mubr.f32.mxu0 0.0
    %1950 = vmatmul.mubr.f32.gmra.mrb[0].mxu0 %v1862
    %v1951 = vpop.f32.mrb[0].mxu0
    %v1952 = vadd.f32 %v1823, %v1951
    %v1953 = vpop.f32.mrb[0].mxu0
    %1954 = vmatprep.mubr.f32.mxu0 0.0
    %1955 = vmatmul.mubr.f32.gmra.mrb[0].mxu0 %v1865
    %v1956 = vpop.f32.mrb[0].mxu0
    %v1957 = vadd.f32 %v1828, %v1956
    %v1958 = vpop.f32.mrb[0].mxu0
    %1959 = vmatprep.mubr.f32.mxu0 0.0
    %1960 = vmatmul.mubr.f32.gmra.mrb[0].mxu0 %v1868
    %v1961 = vpop.f32.mrb[0].mxu0
    %v1962 = vadd.f32 %v1833, %v1961
    %v1963 = vpop.f32.mrb[0].mxu0
    %1964 = vmatprep.mubr.f32.mxu0 0.0
    %1965 = vmatmul.mubr.f32.gmra.mrb[0].mxu0 %v1871
    %v1966 = vpop.f32.mrb[0].mxu0
    %v1967 = vadd.f32 %v1838, %v1966
    %v1968 = vpop.f32.mrb[0].mxu0
    %1969 = vmatprep.mubr.f32.mxu0 0.0
    %1970 = vmatmul.mubr.f32.gmra.mrb[0].mxu0 %v1874
    %v1971 = vpop.f32.mrb[0].mxu0
    %v1972 = vadd.f32 %v1843, %v1971
    %v1973 = vpop.f32.mrb[0].mxu0
    %1974 = vmatprep.mubr.f32.mxu0 0.0
    %1975 = vmatmul.mubr.f32.gmra.mrb[0].mxu0 %v1877
    %v1976 = vpop.f32.mrb[0].mxu0
    %v1977 = vadd.f32 %v1848, %v1976
    %v1978 = vpop.f32.mrb[0].mxu0
    %1979 = vmatprep.mubr.f32.mxu0 0.0
    %1980 = vmatmul.mubr.f32.gmra.mrb[0].mxu0 %v1880
    %v1981 = vpop.f32.mrb[0].mxu0
    %v1982 = vadd.f32 %v1853, %v1981
    %v1983 = vpop.f32.mrb[0].mxu0
    %1984 = vmatprep.mubr.f32.mxu0 0.0
    %1985 = vmatmul.mubr.f32.gmra.mrb[0].mxu0 %v1883
    %v1986 = vpop.f32.mrb[0].mxu0
    %v1987 = vadd.f32 %v1858, %v1986
    %v1988 = vpop.f32.mrb[0].mxu0
    %1989 = vdwg.mxu0
    %vm1990 = vcmp.ge.f32.partialorder %v1952, 0.0
    %vm1991 = vcmp.ge.f32.partialorder %v1957, 0.0
    %vm1992 = vcmp.ge.f32.partialorder %v1962, 0.0
    %vm1993 = vcmp.ge.f32.partialorder %v1967, 0.0
    %vm1994 = vcmp.ge.f32.partialorder %v1972, 0.0
    %vm1995 = vcmp.ge.f32.partialorder %v1977, 0.0
    %vm1996 = vcmp.ge.f32.partialorder %v1982, 0.0
    %vm1997 = vcmp.ge.f32.partialorder %v1987, 0.0
    %v1998 = vmul.f32 %v1952, 0.2
    %v1999 = vmul.f32 %v1957, 0.2
    %v2000 = vmul.f32 %v1962, 0.2
    %v2001 = vmul.f32 %v1967, 0.2
    %v2002 = vmul.f32 %v1972, 0.2
    %v2003 = vmul.f32 %v1977, 0.2
    %v2004 = vmul.f32 %v1982, 0.2
    %v2005 = vmul.f32 %v1987, 0.2
    %v2006 = vsel %vm1990, %v1952, %v1998
    %v2007 = vsel %vm1991, %v1957, %v1999
    %v2008 = vsel %vm1992, %v1962, %v2000
    %v2009 = vsel %vm1993, %v1967, %v2001
    %v2010 = vsel %vm1994, %v1972, %v2002
    %v2011 = vsel %vm1995, %v1977, %v2003
    %v2012 = vsel %vm1996, %v1982, %v2004
    %v2013 = vsel %vm1997, %v1987, %v2005
    %v2014 = vsel %vm649, %v2006, -1e+30
    %v2015 = vsel %vm650, %v2007, -1e+30
    %v2016 = vsel %vm651, %v2008, -1e+30
    %v2017 = vsel %vm652, %v2009, -1e+30
    %v2018 = vsel %vm653, %v2010, -1e+30
    %v2019 = vsel %vm654, %v2011, -1e+30
    %v2020 = vsel %vm655, %v2012, -1e+30
    %v2021 = vsel %vm656, %v2013, -1e+30
    %v2022 = vsel %vm665, %v2014, -inf
    %2023 = vmax.xlane.f32.xlu0 %v2022
    %v2024 = vpop.xlane.xlu0 %2023
    %v2025 = vsel %vm665, %v2015, -inf
    %2026 = vmax.xlane.f32.xlu0 %v2025
    %v2027 = vpop.xlane.xlu0 %2026
    %v2028 = vsel %vm665, %v2016, -inf
    %2029 = vmax.xlane.f32.xlu0 %v2028
    %v2030 = vpop.xlane.xlu0 %2029
    %v2031 = vsel %vm665, %v2017, -inf
    %2032 = vmax.xlane.f32.xlu0 %v2031
    %v2033 = vpop.xlane.xlu0 %2032
    %v2034 = vsel %vm665, %v2018, -inf
    %2035 = vmax.xlane.f32.xlu0 %v2034
    %v2036 = vpop.xlane.xlu0 %2035
    %v2037 = vsel %vm665, %v2019, -inf
    %2038 = vmax.xlane.f32.xlu0 %v2037
    %v2039 = vpop.xlane.xlu0 %2038
    %v2040 = vsel %vm665, %v2020, -inf
    %2041 = vmax.xlane.f32.xlu0 %v2040
    %v2042 = vpop.xlane.xlu0 %2041
    %v2043 = vsel %vm665, %v2021, -inf
    %2044 = vmax.xlane.f32.xlu0 %v2043
    %v2045 = vpop.xlane.xlu0 %2044
    %v2046 = vsub.f32 %v2014, %v2024
    %v2047 = vsub.f32 %v2015, %v2027
    %v2048 = vsub.f32 %v2016, %v2030
    %v2049 = vsub.f32 %v2017, %v2033
    %v2050 = vsub.f32 %v2018, %v2036
    %v2051 = vsub.f32 %v2019, %v2039
    %v2052 = vsub.f32 %v2020, %v2042
    %v2053 = vsub.f32 %v2021, %v2045
    %v2054 = vmul.f32 %v2046, 1.442695
    %v2055 = vpow.pop %v2054
    %v2056 = vmul.f32 %v2047, 1.442695
    %v2057 = vpow.pop %v2056
    %v2058 = vmul.f32 %v2048, 1.442695
    %v2059 = vpow.pop %v2058
    %v2060 = vmul.f32 %v2049, 1.442695
    %v2061 = vpow.pop %v2060
    %v2062 = vmul.f32 %v2050, 1.442695
    %v2063 = vpow.pop %v2062
    %v2064 = vmul.f32 %v2051, 1.442695
    %v2065 = vpow.pop %v2064
    %v2066 = vmul.f32 %v2052, 1.442695
    %v2067 = vpow.pop %v2066
    %v2068 = vmul.f32 %v2053, 1.442695
    %v2069 = vpow.pop %v2068
    %v2070 = vsel %vm665, %v2055, 0.0
    %2071 = vadd.xlane.f32.xlu0 %v2070
    %v2072 = vpop.xlane.xlu0 %2071
    %v2073 = vsel %vm665, %v2057, 0.0
    %2074 = vadd.xlane.f32.xlu0 %v2073
    %v2075 = vpop.xlane.xlu0 %2074
    %v2076 = vsel %vm665, %v2059, 0.0
    %2077 = vadd.xlane.f32.xlu0 %v2076
    %v2078 = vpop.xlane.xlu0 %2077
    %v2079 = vsel %vm665, %v2061, 0.0
    %2080 = vadd.xlane.f32.xlu0 %v2079
    %v2081 = vpop.xlane.xlu0 %2080
    %v2082 = vsel %vm665, %v2063, 0.0
    %2083 = vadd.xlane.f32.xlu0 %v2082
    %v2084 = vpop.xlane.xlu0 %2083
    %v2085 = vsel %vm665, %v2065, 0.0
    %2086 = vadd.xlane.f32.xlu0 %v2085
    %v2087 = vpop.xlane.xlu0 %2086
    %v2088 = vsel %vm665, %v2067, 0.0
    %2089 = vadd.xlane.f32.xlu0 %v2088
    %v2090 = vpop.xlane.xlu0 %2089
    %v2091 = vsel %vm665, %v2069, 0.0
    %2092 = vadd.xlane.f32.xlu0 %v2091
    %v2093 = vpop.xlane.xlu0 %2092
    %v2094 = vrcp.pop %v2072
    %v2095 = vrcp.pop %v2075
    %v2096 = vrcp.pop %v2078
    %v2097 = vrcp.pop %v2081
    %v2098 = vrcp.pop %v2084
    %v2099 = vrcp.pop %v2087
    %v2100 = vrcp.pop %v2090
    %v2101 = vrcp.pop %v2093
    %v2102 = vmul.f32 %v2055, %v2094
    %v2103 = vmul.f32 %v2057, %v2095
    %v2104 = vmul.f32 %v2059, %v2096
    %v2105 = vmul.f32 %v2061, %v2097
    %v2106 = vmul.f32 %v2063, %v2098
    %v2107 = vmul.f32 %v2065, %v2099
    %v2108 = vmul.f32 %v2067, %v2100
    %v2109 = vmul.f32 %v2069, %v2101
    %v2110 = vld [vmem:[%s10 + $0x2] sm:$0x1]
    %v2111 = vlaneseq
    %v2112 = vshrl.u32 %v2111, 7
    %v2113 = vsub.s32 0, %v2112
    %v2114 = vrot.slane %v2110, %v2113
    %v2116 = vsel %vm665, %v2102, 0
    %v2119 = vsel %vm665, %v2103, 0
    %v2122 = vsel %vm665, %v2104, 0
    %v2125 = vsel %vm665, %v2105, 0
    %v2128 = vsel %vm665, %v2106, 0
    %v2131 = vsel %vm665, %v2107, 0
    %v2134 = vsel %vm665, %v2108, 0
    %v2137 = vsel %vm665, %v2109, 0
    %2139 = vmatprep.subr.mxu0 0.0
    %2140 = vmatpush1.msra.mxu0 %v1666
    %2141 = vmatprep.subr.mxu0 0.0
    %2142 = vmatpush1.msra.mxu0 %v1671
    %2143 = vmatprep.subr.mxu0 0.0
    %2144 = vmatpush1.msra.mxu0 %v1676
    %2145 = vmatprep.subr.mxu0 0.0
    %2146 = vmatpush1.msra.mxu0 %v1681
    %2147 = vmatprep.subr.mxu0 0.0
    %2148 = vmatpush1.msra.mxu0 %v1686
    %2149 = vmatprep.subr.mxu0 0.0
    %2150 = vmatpush1.msra.mxu0 %v1691
    %2151 = vmatprep.subr.mxu0 0.0
    %2152 = vmatpush1.msra.mxu0 %v1696
    %2153 = vmatprep.subr.mxu0 0.0
    %2154 = vmatpush1.msra.mxu0 %v1701
    %2155 = vmatprep.subr.mxu0 0.0
    %2156 = vmatpush1.msra.mxu0 0.0
    %2157 = vmatprep.subr.mxu0 0.0
    %2158 = vmatpush1.msra.mxu0 0.0
    %2159 = vmatprep.subr.mxu0 0.0
    %2160 = vmatpush1.msra.mxu0 0.0
    %2161 = vmatprep.subr.mxu0 0.0
    %2162 = vmatpush1.msra.mxu0 0.0
    %2163 = vmatprep.subr.mxu0 0.0
    %2164 = vmatpush1.msra.mxu0 0.0
    %2165 = vmatprep.subr.mxu0 0.0
    %2166 = vmatpush1.msra.mxu0 0.0
    %2167 = vmatprep.subr.mxu0 0.0
    %2168 = vmatpush1.msra.mxu0 0.0
    %2169 = vmatprep.subr.mxu0 0.0
    %2170 = vmatpush1.msra.mxu0 0.0
    %2171 = vmatprep.subr.mxu0 0.0
    %2172 = vmatpush1.msra.mxu0 0.0
    %2173 = vmatprep.subr.mxu0 0.0
    %2174 = vmatpush1.msra.mxu0 0.0
    %2175 = vmatprep.subr.mxu0 0.0
    %2176 = vmatpush1.msra.mxu0 0.0
    %2177 = vmatprep.subr.mxu0 0.0
    %2178 = vmatpush1.msra.mxu0 0.0
    %2179 = vmatprep.subr.mxu0 0.0
    %2180 = vmatpush1.msra.mxu0 0.0
    %2181 = vmatprep.subr.mxu0 0.0
    %2182 = vmatpush1.msra.mxu0 0.0
    %2183 = vmatprep.subr.mxu0 0.0
    %2184 = vmatpush1.msra.mxu0 0.0
    %2185 = vmatprep.subr.mxu0 0.0
    %2186 = vmatpush1.msra.mxu0 0.0
    %2187 = vmatprep.subr.mxu0 0.0
    %2188 = vmatpush1.msra.mxu0 0.0
    %2189 = vmatprep.subr.mxu0 0.0
    %2190 = vmatpush1.msra.mxu0 0.0
    %2191 = vmatprep.subr.mxu0 0.0
    %2192 = vmatpush1.msra.mxu0 0.0
    %2193 = vmatprep.subr.mxu0 0.0
    %2194 = vmatpush1.msra.mxu0 0.0
    %2195 = vmatprep.subr.mxu0 0.0
    %2196 = vmatpush1.msra.mxu0 0.0
    %2197 = vmatprep.subr.mxu0 0.0
    %2198 = vmatpush1.msra.mxu0 0.0
    %2199 = vmatprep.subr.mxu0 0.0
    %2200 = vmatpush1.msra.mxu0 0.0
    %2201 = vmatprep.subr.mxu0 0.0
    %2202 = vmatpush1.msra.mxu0 0.0
    %2203 = vmatprep.mubr.f32.mxu0 0.0
    %2204 = vmatmul.mubr.f32.gmra.mrb[0].mxu0 %v2116
    %v2205 = vpop.f32.mrb[0].mxu0
    %v2206 = vadd.f32 %v2114, %v2205
    %v2207 = vpop.f32.mrb[0].mxu0
    %2208 = vmatprep.mubr.f32.mxu0 0.0
    %2209 = vmatmul.mubr.f32.gmra.mrb[0].mxu0 %v2119
    %v2210 = vpop.f32.mrb[0].mxu0
    %v2211 = vadd.f32 %v2114, %v2210
    %v2212 = vpop.f32.mrb[0].mxu0
    %2213 = vmatprep.mubr.f32.mxu0 0.0
    %2214 = vmatmul.mubr.f32.gmra.mrb[0].mxu0 %v2122
    %v2215 = vpop.f32.mrb[0].mxu0
    %v2216 = vadd.f32 %v2114, %v2215
    %v2217 = vpop.f32.mrb[0].mxu0
    %2218 = vmatprep.mubr.f32.mxu0 0.0
    %2219 = vmatmul.mubr.f32.gmra.mrb[0].mxu0 %v2125
    %v2220 = vpop.f32.mrb[0].mxu0
    %v2221 = vadd.f32 %v2114, %v2220
    %v2222 = vpop.f32.mrb[0].mxu0
    %2223 = vmatprep.mubr.f32.mxu0 0.0
    %2224 = vmatmul.mubr.f32.gmra.mrb[0].mxu0 %v2128
    %v2225 = vpop.f32.mrb[0].mxu0
    %v2226 = vadd.f32 %v2114, %v2225
    %v2227 = vpop.f32.mrb[0].mxu0
    %2228 = vmatprep.mubr.f32.mxu0 0.0
    %2229 = vmatmul.mubr.f32.gmra.mrb[0].mxu0 %v2131
    %v2230 = vpop.f32.mrb[0].mxu0
    %v2231 = vadd.f32 %v2114, %v2230
    %v2232 = vpop.f32.mrb[0].mxu0
    %2233 = vmatprep.mubr.f32.mxu0 0.0
    %2234 = vmatmul.mubr.f32.gmra.mrb[0].mxu0 %v2134
    %v2235 = vpop.f32.mrb[0].mxu0
    %v2236 = vadd.f32 %v2114, %v2235
    %v2237 = vpop.f32.mrb[0].mxu0
    %2238 = vmatprep.mubr.f32.mxu0 0.0
    %2239 = vmatmul.mubr.f32.gmra.mrb[0].mxu0 %v2137
    %v2240 = vpop.f32.mrb[0].mxu0
    %v2241 = vadd.f32 %v2114, %v2240
    %v2242 = vpop.f32.mrb[0].mxu0
    %2243 = vdwg.mxu0
    %v2244 = vld [vmem:[%s3] sm:$0xff]
    %v2245 = vld [vmem:[%s3 + $0x8] sm:$0xff]
    %v2246 = vld [vmem:[%s3 + $0x10] sm:$0xff]
    %v2247 = vld [vmem:[%s3 + $0x18] sm:$0xff]
    %v2248 = vld [vmem:[#allocation2 + $0x1] sm:$0x1]
    %v2249 = vlaneseq
    %v2250 = vshrl.u32 %v2249, 7
    %v2251 = vsub.s32 0, %v2250
    %v2252 = vrot.slane %v2248, %v2251
    %v2254 = vsel %vm98, %v2206, 0
    %v2257 = vsel %vm98, %v2211, 0
    %v2260 = vsel %vm98, %v2216, 0
    %v2263 = vsel %vm98, %v2221, 0
    %v2266 = vsel %vm98, %v2226, 0
    %v2269 = vsel %vm98, %v2231, 0
    %v2272 = vsel %vm98, %v2236, 0
    %v2275 = vsel %vm98, %v2241, 0
    %2277 = vmatprep.subr.mxu0 0.0
    %2278 = vmatpush1.msra.mxu0 %v2244
    %2279 = vmatprep.subr.mxu0 0.0
    %2280 = vmatpush1.msra.mxu0 %v2245
    %2281 = vmatprep.subr.mxu0 0.0
    %2282 = vmatpush1.msra.mxu0 %v2246
    %2283 = vmatprep.subr.mxu0 0.0
    %2284 = vmatpush1.msra.mxu0 %v2247
    %2285 = vmatprep.subr.mxu0 0.0
    %2286 = vmatpush1.msra.mxu0 0.0
    %2287 = vmatprep.subr.mxu0 0.0
    %2288 = vmatpush1.msra.mxu0 0.0
    %2289 = vmatprep.subr.mxu0 0.0
    %2290 = vmatpush1.msra.mxu0 0.0
    %2291 = vmatprep.subr.mxu0 0.0
    %2292 = vmatpush1.msra.mxu0 0.0
    %2293 = vmatprep.subr.mxu0 0.0
    %2294 = vmatpush1.msra.mxu0 0.0
    %2295 = vmatprep.subr.mxu0 0.0
    %2296 = vmatpush1.msra.mxu0 0.0
    %2297 = vmatprep.subr.mxu0 0.0
    %2298 = vmatpush1.msra.mxu0 0.0
    %2299 = vmatprep.subr.mxu0 0.0
    %2300 = vmatpush1.msra.mxu0 0.0
    %2301 = vmatprep.subr.mxu0 0.0
    %2302 = vmatpush1.msra.mxu0 0.0
    %2303 = vmatprep.subr.mxu0 0.0
    %2304 = vmatpush1.msra.mxu0 0.0
    %2305 = vmatprep.subr.mxu0 0.0
    %2306 = vmatpush1.msra.mxu0 0.0
    %2307 = vmatprep.subr.mxu0 0.0
    %2308 = vmatpush1.msra.mxu0 0.0
    %2309 = vmatprep.subr.mxu0 0.0
    %2310 = vmatpush1.msra.mxu0 0.0
    %2311 = vmatprep.subr.mxu0 0.0
    %2312 = vmatpush1.msra.mxu0 0.0
    %2313 = vmatprep.subr.mxu0 0.0
    %2314 = vmatpush1.msra.mxu0 0.0
    %2315 = vmatprep.subr.mxu0 0.0
    %2316 = vmatpush1.msra.mxu0 0.0
    %2317 = vmatprep.subr.mxu0 0.0
    %2318 = vmatpush1.msra.mxu0 0.0
    %2319 = vmatprep.subr.mxu0 0.0
    %2320 = vmatpush1.msra.mxu0 0.0
    %2321 = vmatprep.subr.mxu0 0.0
    %2322 = vmatpush1.msra.mxu0 0.0
    %2323 = vmatprep.subr.mxu0 0.0
    %2324 = vmatpush1.msra.mxu0 0.0
    %2325 = vmatprep.subr.mxu0 0.0
    %2326 = vmatpush1.msra.mxu0 0.0
    %2327 = vmatprep.subr.mxu0 0.0
    %2328 = vmatpush1.msra.mxu0 0.0
    %2329 = vmatprep.subr.mxu0 0.0
    %2330 = vmatpush1.msra.mxu0 0.0
    %2331 = vmatprep.subr.mxu0 0.0
    %2332 = vmatpush1.msra.mxu0 0.0
    %2333 = vmatprep.subr.mxu0 0.0
    %2334 = vmatpush1.msra.mxu0 0.0
    %2335 = vmatprep.subr.mxu0 0.0
    %2336 = vmatpush1.msra.mxu0 0.0
    %2337 = vmatprep.subr.mxu0 0.0
    %2338 = vmatpush1.msra.mxu0 0.0
    %2339 = vmatprep.subr.mxu0 0.0
    %2340 = vmatpush1.msra.mxu0 0.0
    %2341 = vmatprep.mubr.f32.mxu0 0.0
    %2342 = vmatmul.mubr.f32.gmra.mrb[0].mxu0 %v2254
    %v2343 = vpop.f32.mrb[0].mxu0
    %v2344 = vadd.f32 %v2252, %v2343
    %v2345 = vpop.f32.mrb[0].mxu0
    %2346 = vmatprep.mubr.f32.mxu0 0.0
    %2347 = vmatmul.mubr.f32.gmra.mrb[0].mxu0 %v2257
    %v2348 = vpop.f32.mrb[0].mxu0
    %v2349 = vadd.f32 %v2252, %v2348
    %v2350 = vpop.f32.mrb[0].mxu0
    %2351 = vmatprep.mubr.f32.mxu0 0.0
    %2352 = vmatmul.mubr.f32.gmra.mrb[0].mxu0 %v2260
    %v2353 = vpop.f32.mrb[0].mxu0
    %v2354 = vadd.f32 %v2252, %v2353
    %v2355 = vpop.f32.mrb[0].mxu0
    %2356 = vmatprep.mubr.f32.mxu0 0.0
    %2357 = vmatmul.mubr.f32.gmra.mrb[0].mxu0 %v2263
    %v2358 = vpop.f32.mrb[0].mxu0
    %v2359 = vadd.f32 %v2252, %v2358
    %v2360 = vpop.f32.mrb[0].mxu0
    %2361 = vmatprep.mubr.f32.mxu0 0.0
    %2362 = vmatmul.mubr.f32.gmra.mrb[0].mxu0 %v2266
    %v2363 = vpop.f32.mrb[0].mxu0
    %v2364 = vadd.f32 %v2252, %v2363
    %v2365 = vpop.f32.mrb[0].mxu0
    %2366 = vmatprep.mubr.f32.mxu0 0.0
    %2367 = vmatmul.mubr.f32.gmra.mrb[0].mxu0 %v2269
    %v2368 = vpop.f32.mrb[0].mxu0
    %v2369 = vadd.f32 %v2252, %v2368
    %v2370 = vpop.f32.mrb[0].mxu0
    %2371 = vmatprep.mubr.f32.mxu0 0.0
    %2372 = vmatmul.mubr.f32.gmra.mrb[0].mxu0 %v2272
    %v2373 = vpop.f32.mrb[0].mxu0
    %v2374 = vadd.f32 %v2252, %v2373
    %v2375 = vpop.f32.mrb[0].mxu0
    %2376 = vmatprep.mubr.f32.mxu0 0.0
    %2377 = vmatmul.mubr.f32.gmra.mrb[0].mxu0 %v2275
    %v2378 = vpop.f32.mrb[0].mxu0
    %v2379 = vadd.f32 %v2252, %v2378
    %v2380 = vpop.f32.mrb[0].mxu0
    %2381 = vdwg.mxu0
    %v2382 = vmax.f32 %v2344, 0.0
    %v2383 = vmax.f32 %v2349, 0.0
    %v2384 = vmax.f32 %v2354, 0.0
    %v2385 = vmax.f32 %v2359, 0.0
    %v2386 = vmax.f32 %v2364, 0.0
    %v2387 = vmax.f32 %v2369, 0.0
    %v2388 = vmax.f32 %v2374, 0.0
    %v2389 = vmax.f32 %v2379, 0.0
    %v2390 = vadd.f32 %v190, %v2382
    %v2391 = vadd.f32 %v195, %v2383
    %v2392 = vadd.f32 %v200, %v2384
    %v2393 = vadd.f32 %v205, %v2385
    %v2394 = vadd.f32 %v210, %v2386
    %v2395 = vadd.f32 %v215, %v2387
    %v2396 = vadd.f32 %v220, %v2388
    %v2397 = vadd.f32 %v225, %v2389
    %2398 = vst.msk [vmem:[%s11] sm:$0xff] %vm98, %v2390
    %2399 = vst.msk [vmem:[%s11 + $0x8] sm:$0xff] %vm98, %v2391
    %2400 = vst.msk [vmem:[%s11 + $0x10] sm:$0xff] %vm98, %v2392
    %2401 = vst.msk [vmem:[%s11 + $0x18] sm:$0xff] %vm98, %v2393
    %2402 = vst.msk [vmem:[%s11 + $0x20] sm:$0xff] %vm98, %v2394
    %2403 = vst.msk [vmem:[%s11 + $0x28] sm:$0xff] %vm98, %v2395
    %2404 = vst.msk [vmem:[%s11 + $0x30] sm:$0xff] %vm98, %v2396
    %2405 = vst.msk [vmem:[%s11 + $0x38] sm:$0xff] %vm98, %v2397
    // Predicated region
    $region58: #{tpu_custom_call.1} parent=1 // pred_check
      _
    $region59: #{tpu_custom_call.1} parent=1 // pred_check_branch
      %2407 = sbr.rel (0) target = $region61
    $region60: #{tpu_custom_call.1} parent=1 // pred_region
      _
    $region61: #{tpu_custom_call.1} parent=1 // pred_fallthru
      _
    // Predicated region
    $region62: #{tpu_custom_call.1} parent=1 // pred_check
      _
    $region63: #{tpu_custom_call.1} parent=1 // pred_check_branch
      %2409 = sbr.rel (0) target = $region65
    $region64: #{tpu_custom_call.1} parent=1 // pred_region
      _
    $region65: #{tpu_custom_call.1} parent=1 // pred_fallthru
      _
    %2410 = vsyncpa [#allocation3], 1
    %2411 = vsyncpa [#allocation5], 1

</llo_original>
